<compile_context>
chip_gen: v7x
topology: tpu7x:2x2x1
jax: 0.10.0
libtpu: 0.0.40
codegen_flags: <defaults>
</compile_context>

<pallas_src>
import functools

import jax
import jax.numpy as jnp
from jax.experimental import pallas as pl
from jax.experimental.pallas import tpu as pltpu


def _round_up(v, m):
    return ((v + m - 1) // m) * m


# ----------------------------- Pallas kernels ------------------------------

def _sage_relu_kernel(agg_ref, x_ref, wl_ref, wr_ref, b_ref, o_ref):
    # relu(lin_l(mean_agg) + lin_r(x)) ; two bf16 dots, f32 accumulation.
    acc = jnp.dot(agg_ref[...], wl_ref[...], preferred_element_type=jnp.float32)
    acc = acc + jnp.dot(x_ref[...], wr_ref[...],
                        preferred_element_type=jnp.float32)
    acc = acc + b_ref[...]
    o_ref[...] = jnp.maximum(acc, 0.0).astype(o_ref.dtype)


def sage_relu(agg, x, wl, wr, b, *, tile_n=512):
    """agg/x: [N, F] bf16, wl/wr: [F, Hpad] bf16, b: [1, Hpad] f32 -> [N, Hpad] bf16."""
    n, f = x.shape
    hp = wl.shape[1]
    tn = min(_round_up(tile_n, 8), _round_up(n, 8))
    n_pad = _round_up(n, tn)
    if n_pad != n:
        # TODO(synk): mask the tail tile instead of this HBM pad copy for huge N.
        agg = jnp.pad(agg, ((0, n_pad - n), (0, 0)))
        x = jnp.pad(x, ((0, n_pad - n), (0, 0)))
    out = pl.pallas_call(
        _sage_relu_kernel,
        out_shape=jax.ShapeDtypeStruct((n_pad, hp), jnp.bfloat16),
        grid=(n_pad // tn,),
        in_specs=[
            pl.BlockSpec((tn, f), lambda i: (i, 0)),     # agg tile
            pl.BlockSpec((tn, f), lambda i: (i, 0)),     # x tile
            pl.BlockSpec((f, hp), lambda i: (0, 0)),     # lin_l weight (resident)
            pl.BlockSpec((f, hp), lambda i: (0, 0)),     # lin_r weight (resident)
            pl.BlockSpec((1, hp), lambda i: (0, 0)),     # bias
        ],
        out_specs=pl.BlockSpec((tn, hp), lambda i: (i, 0)),
        compiler_params=pltpu.CompilerParams(
            dimension_semantics=("parallel",)),
    )(agg, x, wl, wr, b)
    return out[:n] if n_pad != n else out


def _head_kernel(p_ref, wband_ref, bc_ref, w1_ref, b1_ref, w2_ref, b2_ref,
                 o_ref):
    # TB graphs per step.  p_ref: [TB, k*Hpad] bf16 sort-pooled features.
    # Conv1d (banded weight) + ReLU -> lin1 + ReLU -> (dropout=id, eval) ->
    # lin2 -> log_softmax, all in vregs; single lane-dense [TB, Cpad] store.
    conv = jnp.dot(p_ref[...], wband_ref[...],
                   preferred_element_type=jnp.float32)
    conv = jnp.maximum(conv + bc_ref[...], 0.0)              # [TB, L*OC]
    h = jnp.dot(conv.astype(jnp.bfloat16), w1_ref[...],
                preferred_element_type=jnp.float32) + b1_ref[...]
    h = jnp.maximum(h, 0.0)                                  # [TB, HID]
    z = jnp.dot(h.astype(jnp.bfloat16), w2_ref[...],
                preferred_element_type=jnp.float32) + b2_ref[...]
    m = jnp.max(z, axis=-1, keepdims=True)
    lse = jnp.log(jnp.sum(jnp.exp(z - m), axis=-1, keepdims=True)) + m
    o_ref[...] = z - lse                                     # log_softmax


def head_fused(p_flat, wband, bc, w1f, b1, w2t, b2, *, tb=8):
    """Fused conv1d + flatten + lin1 + relu + lin2 + log_softmax, TB graphs/step."""
    B, kd = p_flat.shape
    locd = wband.shape[1]
    hid = w1f.shape[1]
    cp = w2t.shape[1]
    TB = _round_up(min(tb, max(B, 1)), 8)
    B_pad = _round_up(B, TB)
    if B_pad != B:
        p_flat = jnp.pad(p_flat, ((0, B_pad - B), (0, 0)))
    out = pl.pallas_call(
        _head_kernel,
        out_shape=jax.ShapeDtypeStruct((B_pad, cp), jnp.float32),
        grid=(B_pad // TB,),
        in_specs=[
            pl.BlockSpec((TB, kd), lambda b: (b, 0)),       # pooled slab (TB graphs)
            pl.BlockSpec((kd, locd), lambda b: (0, 0)),     # banded conv1d weight
            pl.BlockSpec((1, locd), lambda b: (0, 0)),      # conv1d bias (tiled)
            pl.BlockSpec((locd, hid), lambda b: (0, 0)),    # lin1 (flatten folded)
            pl.BlockSpec((1, hid), lambda b: (0, 0)),       # lin1 bias
            pl.BlockSpec((hid, cp), lambda b: (0, 0)),      # lin2 weight^T (C-padded)
            pl.BlockSpec((1, cp), lambda b: (0, 0)),        # lin2 bias (-inf padded)
        ],
        out_specs=pl.BlockSpec((TB, cp), lambda b: (b, 0)),
        compiler_params=pltpu.CompilerParams(
            dimension_semantics=("parallel",)),
    )(p_flat, wband, bc, w1f, b1, w2t, b2)
    return out


# ------------------------------- JAX glue ----------------------------------

def mean_aggregate(x, edge_index, num_nodes):
    # PyG SAGEConv mean aggregation over incoming edges (source_to_target).
    src, dst = edge_index[0], edge_index[1]
    msg = x[src].astype(jnp.float32)                 # accumulate in f32
    agg = jax.ops.segment_sum(msg, dst, num_segments=num_nodes)
    deg = jax.ops.segment_sum(jnp.ones((src.shape[0],), jnp.float32), dst,
                              num_segments=num_nodes)
    agg = agg / jnp.maximum(deg, 1.0)[:, None]
    return agg.astype(x.dtype)                       # back to bf16 for DMA


def global_sort_pool(x, batch, k, num_graphs, max_nodes, *, sort_channel,
                     equal_sized=False):
    # Port of torch_geometric.nn.global_sort_pool.  `sort_channel` is the last
    # REAL feature channel (the trailing columns of x are lane padding zeros).
    n, d = x.shape
    if equal_sized:
        # Nodes are contiguous per graph and every graph has max_nodes nodes:
        # the dense layout is a free reshape (no XLA scatter on the hot path).
        dense = x.reshape(num_graphs, max_nodes, d)
        order = jnp.argsort(-dense[:, :, sort_channel].astype(jnp.float32),
                            axis=1)
        dense = jnp.take_along_axis(dense, order[:, :, None], axis=1)
        if max_nodes >= k:
            return dense[:, :k]
        pad = jnp.zeros((num_graphs, k - max_nodes, d), dense.dtype)
        return jnp.concatenate([dense, pad], axis=1)

    # Generic ragged path (f32 internally so fill_value masking stays exact).
    xf = x.astype(jnp.float32)
    fill_value = xf.min() - 1.0
    counts = jax.ops.segment_sum(jnp.ones((n,), jnp.int32), batch,
                                 num_segments=num_graphs)
    starts = jnp.cumsum(counts) - counts
    pos = jnp.arange(n) - starts[batch]
    dense = jnp.full((num_graphs, max_nodes, d), fill_value, jnp.float32)
    dense = dense.at[batch, pos].set(xf)
    order = jnp.argsort(-dense[:, :, sort_channel], axis=1)
    dense = jnp.take_along_axis(dense, order[:, :, None], axis=1)
    if max_nodes >= k:
        dense = dense[:, :k]
    else:
        pad = jnp.full((num_graphs, k - max_nodes, d), fill_value, jnp.float32)
        dense = jnp.concatenate([dense, pad], axis=1)
    dense = jnp.where(dense == fill_value, 0.0, dense)
    return dense.astype(x.dtype)


def prepare_params(raw, *, k, h_pad=128, c_pad=128):
    """One-time weight transforms (padding / reordering hoisted off the hot path)."""
    sage = []
    for li, (wl, bl, wr) in enumerate(raw["sage"]):
        f_in, h = wl.shape
        f_tgt = f_in if li == 0 else h_pad     # layers >0 see lane-padded inputs
        pad_w = lambda w: jnp.pad(
            w, ((0, f_tgt - f_in), (0, h_pad - h))).astype(jnp.bfloat16)
        sage.append((pad_w(wl), pad_w(wr),
                     jnp.pad(bl, (0, h_pad - h)).reshape(1, -1)
                        .astype(jnp.float32)))

    wc, bc = raw["conv1d"]                     # wc: [OC, H, ks] (PyTorch NCW)
    oc, h, ks = wc.shape
    L = k - ks + 1
    # Banded conv weight: Conv1d(H->OC, ks) over the k sorted node rows folded
    # into ONE [k*h_pad, L*OC] matmul on the flattened pooled slab.
    wband = jnp.zeros((k, h_pad, L, oc), jnp.float32)
    for l in range(L):
        for j in range(ks):
            wband = wband.at[l + j, :h, l, :].set(wc[:, :, j].T)
    wband = wband.reshape(k * h_pad, L * oc).astype(jnp.bfloat16)
    bc_flat = jnp.tile(bc, L).reshape(1, L * oc).astype(jnp.float32)

    w1, b1 = raw["lin1"]                       # w1: [HID, OC*L], flatten idx o*L+l
    hid = w1.shape[0]
    # w1f[l*OC + o, m] = w1[m, o*L + l]  (folds the PyTorch NCW flatten perm)
    w1f = jnp.transpose(w1.reshape(hid, oc, L), (2, 1, 0)).reshape(L * oc, hid)
    w1f = w1f.astype(jnp.bfloat16)

    w2, b2 = raw["lin2"]                       # w2: [C, HID]
    c = w2.shape[0]
    w2t = jnp.pad(w2.T, ((0, 0), (0, c_pad - c))).astype(jnp.bfloat16)
    b2p = jnp.full((1, c_pad), -1e30, jnp.float32).at[0, :c].set(b2)

    return {
        "sage": sage,
        "conv": (wband, bc_flat),
        "lin1": (w1f, b1.reshape(1, -1).astype(jnp.float32)),
        "lin2": (w2t, b2p),
    }


def sortpool_forward(x, edge_index, batch, params, *, k, num_graphs, max_nodes,
                     hidden, num_class, sage_tile=512, head_tb=8,
                     equal_sized=False):
    x = x.astype(jnp.bfloat16)
    # SAGEConv stack with ReLU: two-dot Pallas kernel per layer (no HBM concat).
    for wl, wr, b in params["sage"]:
        agg = mean_aggregate(x, edge_index, x.shape[0])
        x = sage_relu(agg, x, wl, wr, b, tile_n=sage_tile)

    pooled = global_sort_pool(x, batch, k, num_graphs, max_nodes,
                              sort_channel=hidden - 1, equal_sized=equal_sized)
    p_flat = pooled.reshape(num_graphs, -1)        # [B, k*Hpad], contiguous

    wband, bc = params["conv"]
    w1f, b1 = params["lin1"]
    w2t, b2 = params["lin2"]
    # Fused conv1d + flatten + lin1 -> relu -> (dropout=id) -> lin2 -> log_softmax.
    logp = head_fused(p_flat, wband, bc, w1f, b1, w2t, b2, tb=head_tb)
    return logp[:num_graphs, :num_class]


# --------------------------------- main -------------------------------------

if __name__ == "__main__":
    key = jax.random.PRNGKey(0)

    # Small, module-consistent config.
    num_features = 8
    hidden = 32
    num_layers = 3            # -> conv1 + 2 extra SAGEConvs, kernel_size = 3
    k_sort = 6                # SortPool k
    # TODO(synk): source sets num_class = 0 (degenerate); using 5 classes here.
    num_class = 5
    num_graphs = 3
    nodes_per_graph = 8
    num_nodes = num_graphs * nodes_per_graph
    num_edges = 48
    ks = num_layers
    L = k_sort - ks + 1

    keys = jax.random.split(key, 16)

    # Graph data (3 equal-size graphs, nodes contiguous per graph).
    x = jax.random.normal(keys[0], (num_nodes, num_features), jnp.float32)
    batch = jnp.repeat(jnp.arange(num_graphs, dtype=jnp.int32), nodes_per_graph)
    e_graph = jax.random.randint(keys[1], (num_edges,), 0, num_graphs)
    e_src = jax.random.randint(keys[2], (num_edges,), 0, nodes_per_graph)
    e_dst = jax.random.randint(keys[3], (num_edges,), 0, nodes_per_graph)
    edge_index = jnp.stack([e_graph * nodes_per_graph + e_src,
                            e_graph * nodes_per_graph + e_dst], axis=0)

    # Deterministic synthetic parameters (shapes per SortPool.__init__).
    def lin_w(kk, fan_in, fan_out):
        return jax.random.normal(kk, (fan_in, fan_out), jnp.float32) / jnp.sqrt(fan_in)

    sage_params = []
    # conv1: SAGEConv(num_features, hidden)
    sage_params.append((lin_w(keys[4], num_features, hidden),
                        jnp.zeros((hidden,), jnp.float32),
                        lin_w(keys[5], num_features, hidden)))
    # convs: (num_layers - 1) x SAGEConv(hidden, hidden)
    for i in range(num_layers - 1):
        sage_params.append((lin_w(keys[6 + 2 * i], hidden, hidden),
                            jnp.zeros((hidden,), jnp.float32),
                            lin_w(keys[7 + 2 * i], hidden, hidden)))

    raw_params = {
        "sage": sage_params,
        "conv1d": (jax.random.normal(keys[10], (32, hidden, ks), jnp.float32)
                   / jnp.sqrt(hidden * ks),
                   jnp.zeros((32,), jnp.float32)),
        "lin1": (jax.random.normal(keys[11], (hidden, 32 * L), jnp.float32)
                 / jnp.sqrt(32 * L),
                 jnp.zeros((hidden,), jnp.float32)),
        "lin2": (jax.random.normal(keys[12], (num_class, hidden), jnp.float32)
                 / jnp.sqrt(hidden),
                 jnp.zeros((num_class,), jnp.float32)),
    }
    params = prepare_params(raw_params, k=k_sort)     # one-time weight transforms

    fwd = jax.jit(functools.partial(
        sortpool_forward, k=k_sort, num_graphs=num_graphs,
        max_nodes=nodes_per_graph, hidden=hidden, num_class=num_class,
        sage_tile=512, head_tb=8, equal_sized=True))

    out = jax.block_until_ready(fwd(x, edge_index, batch, params))
    assert out.shape == (num_graphs, num_class)
    # rows of log_softmax must (exp-)sum to ~1
    assert jnp.allclose(jnp.sum(jnp.exp(out.astype(jnp.float32)), axis=1),
                        1.0, atol=1e-3)
    print("KERNEL_OK")
</pallas_src>

<mosaic_0001>
module attributes {stable_mosaic.version = 11 : i64} {
  func.func private @main(%arg0: i32) attributes {dimension_semantics = [#tpu.dimension_semantics<core_parallel>], iteration_bounds = array<i64: 2>, tpu.core_type = #tpu.core_type<sc_scalar_subcore>, window_params = []} {
    return
  }
}

module attributes {stable_mosaic.version = 11 : i64} {
  func.func private @main(%arg0: i32) attributes {dimension_semantics = [#tpu.dimension_semantics<core_parallel>], iteration_bounds = array<i64: 2>, tpu.core_type = #tpu.core_type<sc_scalar_subcore>, window_params = []} {
    return
  }
}

module attributes {stable_mosaic.version = 11 : i64} {
  func.func @_sage_relu_kernel(%arg0: i32, %arg1: memref<24x128xbf16, #tpu.memory_space<vmem>>, %arg2: memref<24x128xbf16, #tpu.memory_space<vmem>>, %arg3: memref<128x128xbf16, #tpu.memory_space<vmem>>, %arg4: memref<128x128xbf16, #tpu.memory_space<vmem>>, %arg5: memref<1x128xf32, #tpu.memory_space<vmem>>, %arg6: memref<24x128xbf16, #tpu.memory_space<vmem>>) attributes {dimension_semantics = [#tpu.dimension_semantics<parallel>], iteration_bounds = array<i64: 1>, scalar_prefetch = 0 : i64, scratch_operands = 0 : i64, tpu.core_type = #tpu.core_type<tc>, window_params = [{transform_indices = @transform_0, window_bounds = array<i64: 24, 128>}, {transform_indices = @transform_1, window_bounds = array<i64: 24, 128>}, {pipeline_mode = #tpu.pipeline_mode<synchronous>, transform_indices = @transform_2, window_bounds = array<i64: 128, 128>}, {pipeline_mode = #tpu.pipeline_mode<synchronous>, transform_indices = @transform_3, window_bounds = array<i64: 128, 128>}, {pipeline_mode = #tpu.pipeline_mode<synchronous>, transform_indices = @transform_4, window_bounds = array<i64: 1, 128>}, {transform_indices = @transform_5, window_bounds = array<i64: 24, 128>}]} {
    %c0 = arith.constant 0 : index
    %c0_0 = arith.constant 0 : index
    %0 = vector.load %arg1[%c0, %c0_0] : memref<24x128xbf16, #tpu.memory_space<vmem>>, vector<24x128xbf16>
    %c0_1 = arith.constant 0 : index
    %c0_2 = arith.constant 0 : index
    %1 = vector.load %arg3[%c0_1, %c0_2] : memref<128x128xbf16, #tpu.memory_space<vmem>>, vector<128x128xbf16>
    %cst = arith.constant dense<0.000000e+00> : vector<24x128xf32>
    %2 = tpu.matmul %0, %1, %cst {dimension_numbers = #tpu.dot_dimension_numbers<[1], [0], [0], [1], [0, 0, 1, 1], [], []>} : vector<24x128xbf16>, vector<128x128xbf16>, vector<24x128xf32> -> vector<24x128xf32>
    %c0_3 = arith.constant 0 : index
    %c0_4 = arith.constant 0 : index
    %3 = vector.load %arg2[%c0_3, %c0_4] : memref<24x128xbf16, #tpu.memory_space<vmem>>, vector<24x128xbf16>
    %c0_5 = arith.constant 0 : index
    %c0_6 = arith.constant 0 : index
    %4 = vector.load %arg4[%c0_5, %c0_6] : memref<128x128xbf16, #tpu.memory_space<vmem>>, vector<128x128xbf16>
    %cst_7 = arith.constant dense<0.000000e+00> : vector<24x128xf32>
    %5 = tpu.matmul %3, %4, %cst_7 {dimension_numbers = #tpu.dot_dimension_numbers<[1], [0], [0], [1], [0, 0, 1, 1], [], []>} : vector<24x128xbf16>, vector<128x128xbf16>, vector<24x128xf32> -> vector<24x128xf32>
    %6 = arith.addf %2, %5 : vector<24x128xf32>
    %c0_8 = arith.constant 0 : index
    %c0_9 = arith.constant 0 : index
    %7 = vector.load %arg5[%c0_8, %c0_9] : memref<1x128xf32, #tpu.memory_space<vmem>>, vector<1x128xf32>
    %8 = vector.broadcast %7 : vector<1x128xf32> to vector<24x128xf32>
    %9 = arith.addf %6, %8 : vector<24x128xf32>
    %cst_10 = arith.constant 0.000000e+00 : f32
    %10 = vector.broadcast %cst_10 : f32 to vector<24x128xf32>
    %11 = arith.maximumf %9, %10 : vector<24x128xf32>
    %12 = arith.truncf %11 : vector<24x128xf32> to vector<24x128xbf16>
    %c0_11 = arith.constant 0 : index
    %c0_12 = arith.constant 0 : index
    %13 = vector.load %arg6[%c0_11, %c0_12] : memref<24x128xbf16, #tpu.memory_space<vmem>>, vector<24x128xbf16>
    tpu.vector_store %arg6[%c0_11, %c0_12], %12 {strides = array<i32>} : memref<24x128xbf16, #tpu.memory_space<vmem>>, vector<24x128xbf16>,
    return
  }
  func.func @transform_0(%arg0: i32) -> (i32, i32) {
    %c0_i32 = arith.constant 0 : i32
    %c0_i32_0 = arith.constant 0 : i32
    return %arg0, %c0_i32 : i32, i32
  }
  func.func @transform_1(%arg0: i32) -> (i32, i32) {
    %c0_i32 = arith.constant 0 : i32
    %c0_i32_0 = arith.constant 0 : i32
    return %arg0, %c0_i32 : i32, i32
  }
  func.func @transform_2(%arg0: i32) -> (i32, i32) {
    %c0_i32 = arith.constant 0 : i32
    %c0_i32_0 = arith.constant 0 : i32
    %c0_i32_1 = arith.constant 0 : i32
    return %c0_i32, %c0_i32_0 : i32, i32
  }
  func.func @transform_3(%arg0: i32) -> (i32, i32) {
    %c0_i32 = arith.constant 0 : i32
    %c0_i32_0 = arith.constant 0 : i32
    %c0_i32_1 = arith.constant 0 : i32
    return %c0_i32, %c0_i32_0 : i32, i32
  }
  func.func @transform_4(%arg0: i32) -> (i32, i32) {
    %c0_i32 = arith.constant 0 : i32
    %c0_i32_0 = arith.constant 0 : i32
    %c0_i32_1 = arith.constant 0 : i32
    return %c0_i32, %c0_i32_0 : i32, i32
  }
  func.func @transform_5(%arg0: i32) -> (i32, i32) {
    %c0_i32 = arith.constant 0 : i32
    %c0_i32_0 = arith.constant 0 : i32
    return %arg0, %c0_i32 : i32, i32
  }
}

module attributes {stable_mosaic.version = 11 : i64} {
  func.func @_sage_relu_kernel(%arg0: i32, %arg1: memref<24x8xbf16, #tpu.memory_space<vmem>>, %arg2: memref<24x8xbf16, #tpu.memory_space<vmem>>, %arg3: memref<8x128xbf16, #tpu.memory_space<vmem>>, %arg4: memref<8x128xbf16, #tpu.memory_space<vmem>>, %arg5: memref<1x128xf32, #tpu.memory_space<vmem>>, %arg6: memref<24x128xbf16, #tpu.memory_space<vmem>>) attributes {dimension_semantics = [#tpu.dimension_semantics<parallel>], iteration_bounds = array<i64: 1>, scalar_prefetch = 0 : i64, scratch_operands = 0 : i64, tpu.core_type = #tpu.core_type<tc>, window_params = [{transform_indices = @transform_0, window_bounds = array<i64: 24, 8>}, {transform_indices = @transform_1, window_bounds = array<i64: 24, 8>}, {pipeline_mode = #tpu.pipeline_mode<synchronous>, transform_indices = @transform_2, window_bounds = array<i64: 8, 128>}, {pipeline_mode = #tpu.pipeline_mode<synchronous>, transform_indices = @transform_3, window_bounds = array<i64: 8, 128>}, {pipeline_mode = #tpu.pipeline_mode<synchronous>, transform_indices = @transform_4, window_bounds = array<i64: 1, 128>}, {transform_indices = @transform_5, window_bounds = array<i64: 24, 128>}]} {
    %c0 = arith.constant 0 : index
    %c0_0 = arith.constant 0 : index
    %0 = vector.load %arg1[%c0, %c0_0] : memref<24x8xbf16, #tpu.memory_space<vmem>>, vector<24x8xbf16>
    %c0_1 = arith.constant 0 : index
    %c0_2 = arith.constant 0 : index
    %1 = vector.load %arg3[%c0_1, %c0_2] : memref<8x128xbf16, #tpu.memory_space<vmem>>, vector<8x128xbf16>
    %cst = arith.constant dense<0.000000e+00> : vector<24x128xf32>
    %2 = tpu.matmul %0, %1, %cst {dimension_numbers = #tpu.dot_dimension_numbers<[1], [0], [0], [1], [0, 0, 1, 1], [], []>} : vector<24x8xbf16>, vector<8x128xbf16>, vector<24x128xf32> -> vector<24x128xf32>
    %c0_3 = arith.constant 0 : index
    %c0_4 = arith.constant 0 : index
    %3 = vector.load %arg2[%c0_3, %c0_4] : memref<24x8xbf16, #tpu.memory_space<vmem>>, vector<24x8xbf16>
    %c0_5 = arith.constant 0 : index
    %c0_6 = arith.constant 0 : index
    %4 = vector.load %arg4[%c0_5, %c0_6] : memref<8x128xbf16, #tpu.memory_space<vmem>>, vector<8x128xbf16>
    %cst_7 = arith.constant dense<0.000000e+00> : vector<24x128xf32>
    %5 = tpu.matmul %3, %4, %cst_7 {dimension_numbers = #tpu.dot_dimension_numbers<[1], [0], [0], [1], [0, 0, 1, 1], [], []>} : vector<24x8xbf16>, vector<8x128xbf16>, vector<24x128xf32> -> vector<24x128xf32>
    %6 = arith.addf %2, %5 : vector<24x128xf32>
    %c0_8 = arith.constant 0 : index
    %c0_9 = arith.constant 0 : index
    %7 = vector.load %arg5[%c0_8, %c0_9] : memref<1x128xf32, #tpu.memory_space<vmem>>, vector<1x128xf32>
    %8 = vector.broadcast %7 : vector<1x128xf32> to vector<24x128xf32>
    %9 = arith.addf %6, %8 : vector<24x128xf32>
    %cst_10 = arith.constant 0.000000e+00 : f32
    %10 = vector.broadcast %cst_10 : f32 to vector<24x128xf32>
    %11 = arith.maximumf %9, %10 : vector<24x128xf32>
    %12 = arith.truncf %11 : vector<24x128xf32> to vector<24x128xbf16>
    %c0_11 = arith.constant 0 : index
    %c0_12 = arith.constant 0 : index
    %13 = vector.load %arg6[%c0_11, %c0_12] : memref<24x128xbf16, #tpu.memory_space<vmem>>, vector<24x128xbf16>
    tpu.vector_store %arg6[%c0_11, %c0_12], %12 {strides = array<i32>} : memref<24x128xbf16, #tpu.memory_space<vmem>>, vector<24x128xbf16>,
    return
  }
  func.func @transform_0(%arg0: i32) -> (i32, i32) {
    %c0_i32 = arith.constant 0 : i32
    %c0_i32_0 = arith.constant 0 : i32
    return %arg0, %c0_i32 : i32, i32
  }
  func.func @transform_1(%arg0: i32) -> (i32, i32) {
    %c0_i32 = arith.constant 0 : i32
    %c0_i32_0 = arith.constant 0 : i32
    return %arg0, %c0_i32 : i32, i32
  }
  func.func @transform_2(%arg0: i32) -> (i32, i32) {
    %c0_i32 = arith.constant 0 : i32
    %c0_i32_0 = arith.constant 0 : i32
    %c0_i32_1 = arith.constant 0 : i32
    return %c0_i32, %c0_i32_0 : i32, i32
  }
  func.func @transform_3(%arg0: i32) -> (i32, i32) {
    %c0_i32 = arith.constant 0 : i32
    %c0_i32_0 = arith.constant 0 : i32
    %c0_i32_1 = arith.constant 0 : i32
    return %c0_i32, %c0_i32_0 : i32, i32
  }
  func.func @transform_4(%arg0: i32) -> (i32, i32) {
    %c0_i32 = arith.constant 0 : i32
    %c0_i32_0 = arith.constant 0 : i32
    %c0_i32_1 = arith.constant 0 : i32
    return %c0_i32, %c0_i32_0 : i32, i32
  }
  func.func @transform_5(%arg0: i32) -> (i32, i32) {
    %c0_i32 = arith.constant 0 : i32
    %c0_i32_0 = arith.constant 0 : i32
    return %arg0, %c0_i32 : i32, i32
  }
}

module attributes {stable_mosaic.version = 11 : i64} {
  func.func @_head_kernel(%arg0: i32, %arg1: memref<8x768xbf16, #tpu.memory_space<vmem>>, %arg2: memref<768x128xbf16, #tpu.memory_space<vmem>>, %arg3: memref<1x128xf32, #tpu.memory_space<vmem>>, %arg4: memref<128x32xbf16, #tpu.memory_space<vmem>>, %arg5: memref<1x32xf32, #tpu.memory_space<vmem>>, %arg6: memref<32x128xbf16, #tpu.memory_space<vmem>>, %arg7: memref<1x128xf32, #tpu.memory_space<vmem>>, %arg8: memref<8x128xf32, #tpu.memory_space<vmem>>) attributes {dimension_semantics = [#tpu.dimension_semantics<parallel>], iteration_bounds = array<i64: 1>, scalar_prefetch = 0 : i64, scratch_operands = 0 : i64, tpu.core_type = #tpu.core_type<tc>, window_params = [{transform_indices = @transform_0, window_bounds = array<i64: 8, 768>}, {pipeline_mode = #tpu.pipeline_mode<synchronous>, transform_indices = @transform_1, window_bounds = array<i64: 768, 128>}, {pipeline_mode = #tpu.pipeline_mode<synchronous>, transform_indices = @transform_2, window_bounds = array<i64: 1, 128>}, {pipeline_mode = #tpu.pipeline_mode<synchronous>, transform_indices = @transform_3, window_bounds = array<i64: 128, 32>}, {pipeline_mode = #tpu.pipeline_mode<synchronous>, transform_indices = @transform_4, window_bounds = array<i64: 1, 32>}, {pipeline_mode = #tpu.pipeline_mode<synchronous>, transform_indices = @transform_5, window_bounds = array<i64: 32, 128>}, {pipeline_mode = #tpu.pipeline_mode<synchronous>, transform_indices = @transform_6, window_bounds = array<i64: 1, 128>}, {transform_indices = @transform_7, window_bounds = array<i64: 8, 128>}]} {
    %c0 = arith.constant 0 : index
    %c0_0 = arith.constant 0 : index
    %0 = vector.load %arg1[%c0, %c0_0] : memref<8x768xbf16, #tpu.memory_space<vmem>>, vector<8x768xbf16>
    %c0_1 = arith.constant 0 : index
    %c0_2 = arith.constant 0 : index
    %1 = vector.load %arg2[%c0_1, %c0_2] : memref<768x128xbf16, #tpu.memory_space<vmem>>, vector<768x128xbf16>
    %cst = arith.constant dense<0.000000e+00> : vector<8x128xf32>
    %2 = tpu.matmul %0, %1, %cst {dimension_numbers = #tpu.dot_dimension_numbers<[1], [0], [0], [1], [0, 0, 1, 1], [], []>} : vector<8x768xbf16>, vector<768x128xbf16>, vector<8x128xf32> -> vector<8x128xf32>
    %c0_3 = arith.constant 0 : index
    %c0_4 = arith.constant 0 : index
    %3 = vector.load %arg3[%c0_3, %c0_4] : memref<1x128xf32, #tpu.memory_space<vmem>>, vector<1x128xf32>
    %4 = vector.broadcast %3 : vector<1x128xf32> to vector<8x128xf32>
    %5 = arith.addf %2, %4 : vector<8x128xf32>
    %cst_5 = arith.constant 0.000000e+00 : f32
    %6 = vector.broadcast %cst_5 : f32 to vector<8x128xf32>
    %7 = arith.maximumf %5, %6 : vector<8x128xf32>
    %8 = arith.truncf %7 : vector<8x128xf32> to vector<8x128xbf16>
    %c0_6 = arith.constant 0 : index
    %c0_7 = arith.constant 0 : index
    %9 = vector.load %arg4[%c0_6, %c0_7] : memref<128x32xbf16, #tpu.memory_space<vmem>>, vector<128x32xbf16>
    %cst_8 = arith.constant dense<0.000000e+00> : vector<8x32xf32>
    %10 = tpu.matmul %8, %9, %cst_8 {dimension_numbers = #tpu.dot_dimension_numbers<[1], [0], [0], [1], [0, 0, 1, 1], [], []>} : vector<8x128xbf16>, vector<128x32xbf16>, vector<8x32xf32> -> vector<8x32xf32>
    %c0_9 = arith.constant 0 : index
    %c0_10 = arith.constant 0 : index
    %11 = vector.load %arg5[%c0_9, %c0_10] : memref<1x32xf32, #tpu.memory_space<vmem>>, vector<1x32xf32>
    %12 = vector.broadcast %11 : vector<1x32xf32> to vector<8x32xf32>
    %13 = arith.addf %10, %12 : vector<8x32xf32>
    %cst_11 = arith.constant 0.000000e+00 : f32
    %14 = vector.broadcast %cst_11 : f32 to vector<8x32xf32>
    %15 = arith.maximumf %13, %14 : vector<8x32xf32>
    %16 = arith.truncf %15 : vector<8x32xf32> to vector<8x32xbf16>
    %c0_12 = arith.constant 0 : index
    %c0_13 = arith.constant 0 : index
    %17 = vector.load %arg6[%c0_12, %c0_13] : memref<32x128xbf16, #tpu.memory_space<vmem>>, vector<32x128xbf16>
    %cst_14 = arith.constant dense<0.000000e+00> : vector<8x128xf32>
    %18 = tpu.matmul %16, %17, %cst_14 {dimension_numbers = #tpu.dot_dimension_numbers<[1], [0], [0], [1], [0, 0, 1, 1], [], []>} : vector<8x32xbf16>, vector<32x128xbf16>, vector<8x128xf32> -> vector<8x128xf32>
    %c0_15 = arith.constant 0 : index
    %c0_16 = arith.constant 0 : index
    %19 = vector.load %arg7[%c0_15, %c0_16] : memref<1x128xf32, #tpu.memory_space<vmem>>, vector<1x128xf32>
    %20 = vector.broadcast %19 : vector<1x128xf32> to vector<8x128xf32>
    %21 = arith.addf %18, %20 : vector<8x128xf32>
    %cst_17 = arith.constant dense<0xFF800000> : vector<8xf32>
    %22 = vector.multi_reduction <maximumf>, %21, %cst_17 [1] : vector<8x128xf32> to vector<8xf32>
    %23 = vector.shape_cast %22 : vector<8xf32> to vector<8x1xf32>
    %24 = vector.broadcast %23 : vector<8x1xf32> to vector<8x128xf32>
    %25 = arith.subf %21, %24 : vector<8x128xf32>
    %26 = math.exp %25 : vector<8x128xf32>
    %cst_18 = arith.constant dense<0.000000e+00> : vector<8xf32>
    %27 = vector.multi_reduction <add>, %26, %cst_18 [1] : vector<8x128xf32> to vector<8xf32>
    %28 = vector.shape_cast %27 : vector<8xf32> to vector<8x1xf32>
    %29 = math.log %28 : vector<8x1xf32>
    %30 = arith.addf %29, %23 : vector<8x1xf32>
    %31 = vector.broadcast %30 : vector<8x1xf32> to vector<8x128xf32>
    %32 = arith.subf %21, %31 : vector<8x128xf32>
    %c0_19 = arith.constant 0 : index
    %c0_20 = arith.constant 0 : index
    %33 = vector.load %arg8[%c0_19, %c0_20] : memref<8x128xf32, #tpu.memory_space<vmem>>, vector<8x128xf32>
    tpu.vector_store %arg8[%c0_19, %c0_20], %32 {strides = array<i32>} : memref<8x128xf32, #tpu.memory_space<vmem>>, vector<8x128xf32>,
    return
  }
  func.func @transform_0(%arg0: i32) -> (i32, i32) {
    %c0_i32 = arith.constant 0 : i32
    %c0_i32_0 = arith.constant 0 : i32
    return %arg0, %c0_i32 : i32, i32
  }
  func.func @transform_1(%arg0: i32) -> (i32, i32) {
    %c0_i32 = arith.constant 0 : i32
    %c0_i32_0 = arith.constant 0 : i32
    %c0_i32_1 = arith.constant 0 : i32
    return %c0_i32, %c0_i32_0 : i32, i32
  }
  func.func @transform_2(%arg0: i32) -> (i32, i32) {
    %c0_i32 = arith.constant 0 : i32
    %c0_i32_0 = arith.constant 0 : i32
    %c0_i32_1 = arith.constant 0 : i32
    return %c0_i32, %c0_i32_0 : i32, i32
  }
  func.func @transform_3(%arg0: i32) -> (i32, i32) {
    %c0_i32 = arith.constant 0 : i32
    %c0_i32_0 = arith.constant 0 : i32
    %c0_i32_1 = arith.constant 0 : i32
    return %c0_i32, %c0_i32_0 : i32, i32
  }
  func.func @transform_4(%arg0: i32) -> (i32, i32) {
    %c0_i32 = arith.constant 0 : i32
    %c0_i32_0 = arith.constant 0 : i32
    %c0_i32_1 = arith.constant 0 : i32
    return %c0_i32, %c0_i32_0 : i32, i32
  }
  func.func @transform_5(%arg0: i32) -> (i32, i32) {
    %c0_i32 = arith.constant 0 : i32
    %c0_i32_0 = arith.constant 0 : i32
    %c0_i32_1 = arith.constant 0 : i32
    return %c0_i32, %c0_i32_0 : i32, i32
  }
  func.func @transform_6(%arg0: i32) -> (i32, i32) {
    %c0_i32 = arith.constant 0 : i32
    %c0_i32_0 = arith.constant 0 : i32
    %c0_i32_1 = arith.constant 0 : i32
    return %c0_i32, %c0_i32_0 : i32, i32
  }
  func.func @transform_7(%arg0: i32) -> (i32, i32) {
    %c0_i32 = arith.constant 0 : i32
    %c0_i32_0 = arith.constant 0 : i32
    return %arg0, %c0_i32 : i32, i32
  }
}

</mosaic_0001>

<llo_original>
// kernel: sortpool_forward.5
$region0: #{sortpool_forward.5}
  #allocation0 [shape = 'u32[]', space=smem, size = 0x4, offset = 0x4, fixed_abs, tag = 'smem constant byte address 0x4 - core index']
  #allocation1 [shape = 'u32[144,128]{1,0:T(1,128)}', space=vmem, size = 0x12000, scoped, tag = 'internal scratch']
  %s0 = inlined_call_operand.vmem [shape: bf16[24,128], index: 0, kind: input, shape index: {}]
  %s1 = inlined_call_operand.vmem [shape: bf16[24,128], index: 1, kind: input, shape index: {}]
  %s2 = inlined_call_operand.vmem [shape: bf16[128,128], index: 2, kind: input, shape index: {}]
  %s3 = inlined_call_operand.vmem [shape: bf16[128,128], index: 3, kind: input, shape index: {}]
  %s4 = inlined_call_operand.vmem [shape: f32[1,128], index: 4, kind: input, shape index: {}]
  %s5 = inlined_call_operand.vmem [shape: bf16[24,128], index: 5, kind: output, shape index: {}]
  %s6 = sld [smem:[#allocation0]]
  $region30: #{sortpool_forward.5} parent=0
    _
  %s8 = ssub.s32 1, %s6
  %s9 = scalar_select 0, %s8, %s6
  // Predicated region
  $region2: #{sortpool_forward.5} parent=0 // pred_check
    _
  $region3: #{sortpool_forward.5} parent=0 // pred_check_branch
    %11 = sbr.rel (0) target = $region5
  $region4: #{sortpool_forward.5} parent=0 // pred_region
    _
  $region5: #{sortpool_forward.5} parent=0 // pred_fallthru
    _
  // Predicated region
  $region6: #{sortpool_forward.5} parent=0 // pred_check
    _
  $region7: #{sortpool_forward.5} parent=0 // pred_check_branch
    %13 = sbr.rel (0) target = $region9
  $region8: #{sortpool_forward.5} parent=0 // pred_region
    _
  $region9: #{sortpool_forward.5} parent=0 // pred_fallthru
    _
  // Predicated region
  $region10: #{sortpool_forward.5} parent=0 // pred_check
    _
  $region11: #{sortpool_forward.5} parent=0 // pred_check_branch
    %15 = sbr.rel (0) target = $region13
  $region12: #{sortpool_forward.5} parent=0 // pred_region
    _
  $region13: #{sortpool_forward.5} parent=0 // pred_fallthru
    _
  // Predicated region
  $region14: #{sortpool_forward.5} parent=0 // pred_check
    _
  $region15: #{sortpool_forward.5} parent=0 // pred_check_branch
    %17 = sbr.rel (0) target = $region17
  $region16: #{sortpool_forward.5} parent=0 // pred_region
    _
  $region17: #{sortpool_forward.5} parent=0 // pred_fallthru
    _
  // Predicated region
  $region18: #{sortpool_forward.5} parent=0 // pred_check
    _
  $region19: #{sortpool_forward.5} parent=0 // pred_check_branch
    %19 = sbr.rel (0) target = $region21
  $region20: #{sortpool_forward.5} parent=0 // pred_region
    _
  $region21: #{sortpool_forward.5} parent=0 // pred_fallthru
    _
  %v21 = vld [vmem:[%s0] sm:$0xf]
  %v22 = vld [vmem:[%s0 + $0x4] sm:$0xf]
  %v23 = vld [vmem:[%s0 + $0x8] sm:$0xf]
  %v24 = vld [vmem:[%s2] sm:$0xf]
  %v25 = vld [vmem:[%s2 + $0x4] sm:$0xf]
  %v26 = vld [vmem:[%s2 + $0x8] sm:$0xf]
  %v27 = vld [vmem:[%s2 + $0xc] sm:$0xf]
  %v28 = vld [vmem:[%s2 + $0x10] sm:$0xf]
  %v29 = vld [vmem:[%s2 + $0x14] sm:$0xf]
  %v30 = vld [vmem:[%s2 + $0x18] sm:$0xf]
  %v31 = vld [vmem:[%s2 + $0x1c] sm:$0xf]
  %v32 = vld [vmem:[%s2 + $0x20] sm:$0xf]
  %v33 = vld [vmem:[%s2 + $0x24] sm:$0xf]
  %v34 = vld [vmem:[%s2 + $0x28] sm:$0xf]
  %v35 = vld [vmem:[%s2 + $0x2c] sm:$0xf]
  %v36 = vld [vmem:[%s2 + $0x30] sm:$0xf]
  %v37 = vld [vmem:[%s2 + $0x34] sm:$0xf]
  %v38 = vld [vmem:[%s2 + $0x38] sm:$0xf]
  %v39 = vld [vmem:[%s2 + $0x3c] sm:$0xf]
  %v40 = vld [vmem:[%s1] sm:$0xf]
  %v41 = vld [vmem:[%s1 + $0x4] sm:$0xf]
  %v42 = vld [vmem:[%s1 + $0x8] sm:$0xf]
  %v43 = vld [vmem:[%s3] sm:$0xf]
  %v44 = vld [vmem:[%s3 + $0x4] sm:$0xf]
  %v45 = vld [vmem:[%s3 + $0x8] sm:$0xf]
  %v46 = vld [vmem:[%s3 + $0xc] sm:$0xf]
  %v47 = vld [vmem:[%s3 + $0x10] sm:$0xf]
  %v48 = vld [vmem:[%s3 + $0x14] sm:$0xf]
  %v49 = vld [vmem:[%s3 + $0x18] sm:$0xf]
  %v50 = vld [vmem:[%s3 + $0x1c] sm:$0xf]
  %v51 = vld [vmem:[%s3 + $0x20] sm:$0xf]
  %v52 = vld [vmem:[%s3 + $0x24] sm:$0xf]
  %v53 = vld [vmem:[%s3 + $0x28] sm:$0xf]
  %v54 = vld [vmem:[%s3 + $0x2c] sm:$0xf]
  %v55 = vld [vmem:[%s3 + $0x30] sm:$0xf]
  %v56 = vld [vmem:[%s3 + $0x34] sm:$0xf]
  %v57 = vld [vmem:[%s3 + $0x38] sm:$0xf]
  %v58 = vld [vmem:[%s3 + $0x3c] sm:$0xf]
  %v62 = vunpack.c.l.b16 %v40
  %v63 = vunpack.c.l.b16 %v41
  %v64 = vunpack.c.l.b16 %v42
  %v65 = vpack.c.b16 %v63, %v62
  %v66 = vpack.c.b16 %v64, %v64
  %v85 = vunpack.c.l.b16 %v43
  %v86 = vunpack.c.l.b16 %v44
  %v87 = vunpack.c.l.b16 %v45
  %v88 = vunpack.c.l.b16 %v46
  %v89 = vunpack.c.l.b16 %v47
  %v90 = vunpack.c.l.b16 %v48
  %v91 = vunpack.c.l.b16 %v49
  %v92 = vunpack.c.l.b16 %v50
  %v93 = vunpack.c.l.b16 %v51
  %v94 = vunpack.c.l.b16 %v52
  %v95 = vunpack.c.l.b16 %v53
  %v96 = vunpack.c.l.b16 %v54
  %v97 = vunpack.c.l.b16 %v55
  %v98 = vunpack.c.l.b16 %v56
  %v99 = vunpack.c.l.b16 %v57
  %v100 = vunpack.c.l.b16 %v58
  %v101 = vpack.c.b16 %v86, %v85
  %v102 = vpack.c.b16 %v88, %v87
  %v103 = vpack.c.b16 %v90, %v89
  %v104 = vpack.c.b16 %v92, %v91
  %v105 = vpack.c.b16 %v94, %v93
  %v106 = vpack.c.b16 %v96, %v95
  %v107 = vpack.c.b16 %v98, %v97
  %v108 = vpack.c.b16 %v100, %v99
  %117 = vmatprep.subr.bf16.mxu0 0
  %118 = vmatpush1.bf16.msra.mxu0 %v101
  %119 = vmatprep.subr.bf16.mxu0 0
  %120 = vmatpush1.bf16.msra.mxu0 %v102
  %121 = vmatprep.subr.bf16.mxu0 0
  %122 = vmatpush1.bf16.msra.mxu0 %v103
  %123 = vmatprep.subr.bf16.mxu0 0
  %124 = vmatpush1.bf16.msra.mxu0 %v104
  %125 = vmatprep.subr.bf16.mxu0 0
  %126 = vmatpush1.bf16.msra.mxu0 %v105
  %127 = vmatprep.subr.bf16.mxu0 0
  %128 = vmatpush1.bf16.msra.mxu0 %v106
  %129 = vmatprep.subr.bf16.mxu0 0
  %130 = vmatpush1.bf16.msra.mxu0 %v107
  %131 = vmatprep.subr.bf16.mxu0 0
  %132 = vmatpush1.bf16.msra.mxu0 %v108
  %133 = vmatprep.subr.bf16.mxu0 0
  %134 = vmatpush1.bf16.msra.mxu0 0
  %135 = vmatprep.subr.bf16.mxu0 0
  %136 = vmatpush1.bf16.msra.mxu0 0
  %137 = vmatprep.subr.bf16.mxu0 0
  %138 = vmatpush1.bf16.msra.mxu0 0
  %139 = vmatprep.subr.bf16.mxu0 0
  %140 = vmatpush1.bf16.msra.mxu0 0
  %141 = vmatprep.subr.bf16.mxu0 0
  %142 = vmatpush1.bf16.msra.mxu0 0
  %143 = vmatprep.subr.bf16.mxu0 0
  %144 = vmatpush1.bf16.msra.mxu0 0
  %145 = vmatprep.subr.bf16.mxu0 0
  %146 = vmatpush1.bf16.msra.mxu0 0
  %147 = vmatprep.subr.bf16.mxu0 0
  %148 = vmatpush1.bf16.msra.mxu0 0
  %149 = vmatprep.mubr.bf16.mxu0 0
  %150 = vmatmul.mubr.bf16.gmra.mrb[0].mxu0 %v65
  %v151 = vpop.f32.mrb[0].mxu0
  %v152 = vadd.f32 0.0, %v151
  %v153 = vpop.f32.mrb[0].mxu0
  %v154 = vpop.f32.mrb[0].mxu0
  %v155 = vadd.f32 0.0, %v154
  %v156 = vpop.f32.mrb[0].mxu0
  %157 = vmatprep.mubr.bf16.mxu0 0
  %158 = vmatmul.mubr.bf16.gmra.mrb[0].mxu0 %v66
  %v159 = vpop.f32.mrb[0].mxu0
  %v160 = vadd.f32 0.0, %v159
  %v161 = vpop.f32.mrb[0].mxu0
  %v162 = vpop.f32.mrb[0].mxu0
  %v163 = vpop.f32.mrb[0].mxu0
  %164 = vdwg.mxu0
  %v168 = vunpack.c.l.b16 %v21
  %v169 = vunpack.c.l.b16 %v22
  %v170 = vunpack.c.l.b16 %v23
  %v171 = vpack.c.b16 %v169, %v168
  %v172 = vpack.c.b16 %v170, %v170
  %v191 = vunpack.c.l.b16 %v24
  %v192 = vunpack.c.l.b16 %v25
  %v193 = vunpack.c.l.b16 %v26
  %v194 = vunpack.c.l.b16 %v27
  %v195 = vunpack.c.l.b16 %v28
  %v196 = vunpack.c.l.b16 %v29
  %v197 = vunpack.c.l.b16 %v30
  %v198 = vunpack.c.l.b16 %v31
  %v199 = vunpack.c.l.b16 %v32
  %v200 = vunpack.c.l.b16 %v33
  %v201 = vunpack.c.l.b16 %v34
  %v202 = vunpack.c.l.b16 %v35
  %v203 = vunpack.c.l.b16 %v36
  %v204 = vunpack.c.l.b16 %v37
  %v205 = vunpack.c.l.b16 %v38
  %v206 = vunpack.c.l.b16 %v39
  %v207 = vpack.c.b16 %v192, %v191
  %v208 = vpack.c.b16 %v194, %v193
  %v209 = vpack.c.b16 %v196, %v195
  %v210 = vpack.c.b16 %v198, %v197
  %v211 = vpack.c.b16 %v200, %v199
  %v212 = vpack.c.b16 %v202, %v201
  %v213 = vpack.c.b16 %v204, %v203
  %v214 = vpack.c.b16 %v206, %v205
  %223 = vmatprep.subr.bf16.mxu0 0
  %224 = vmatpush1.bf16.msra.mxu0 %v207
  %225 = vmatprep.subr.bf16.mxu0 0
  %226 = vmatpush1.bf16.msra.mxu0 %v208
  %227 = vmatprep.subr.bf16.mxu0 0
  %228 = vmatpush1.bf16.msra.mxu0 %v209
  %229 = vmatprep.subr.bf16.mxu0 0
  %230 = vmatpush1.bf16.msra.mxu0 %v210
  %231 = vmatprep.subr.bf16.mxu0 0
  %232 = vmatpush1.bf16.msra.mxu0 %v211
  %233 = vmatprep.subr.bf16.mxu0 0
  %234 = vmatpush1.bf16.msra.mxu0 %v212
  %235 = vmatprep.subr.bf16.mxu0 0
  %236 = vmatpush1.bf16.msra.mxu0 %v213
  %237 = vmatprep.subr.bf16.mxu0 0
  %238 = vmatpush1.bf16.msra.mxu0 %v214
  %239 = vmatprep.subr.bf16.mxu0 0
  %240 = vmatpush1.bf16.msra.mxu0 0
  %241 = vmatprep.subr.bf16.mxu0 0
  %242 = vmatpush1.bf16.msra.mxu0 0
  %243 = vmatprep.subr.bf16.mxu0 0
  %244 = vmatpush1.bf16.msra.mxu0 0
  %245 = vmatprep.subr.bf16.mxu0 0
  %246 = vmatpush1.bf16.msra.mxu0 0
  %247 = vmatprep.subr.bf16.mxu0 0
  %248 = vmatpush1.bf16.msra.mxu0 0
  %249 = vmatprep.subr.bf16.mxu0 0
  %250 = vmatpush1.bf16.msra.mxu0 0
  %251 = vmatprep.subr.bf16.mxu0 0
  %252 = vmatpush1.bf16.msra.mxu0 0
  %253 = vmatprep.subr.bf16.mxu0 0
  %254 = vmatpush1.bf16.msra.mxu0 0
  %255 = vmatprep.mubr.bf16.mxu0 0
  %256 = vmatmul.mubr.bf16.gmra.mrb[0].mxu0 %v171
  %v257 = vpop.f32.mrb[0].mxu0
  %v258 = vadd.f32 %v152, %v257
  %v259 = vpop.f32.mrb[0].mxu0
  %v260 = vpop.f32.mrb[0].mxu0
  %v261 = vadd.f32 %v155, %v260
  %v262 = vpop.f32.mrb[0].mxu0
  %263 = vmatprep.mubr.bf16.mxu0 0
  %264 = vmatmul.mubr.bf16.gmra.mrb[0].mxu0 %v172
  %v265 = vpop.f32.mrb[0].mxu0
  %v266 = vadd.f32 %v160, %v265
  %v267 = vpop.f32.mrb[0].mxu0
  %v268 = vpop.f32.mrb[0].mxu0
  %v269 = vpop.f32.mrb[0].mxu0
  %270 = vdwg.mxu0
  %v271 = vld [vmem:[%s4] sm:$0x1]
  %v273 = vlaneseq
  %v274 = vshrl.u32 %v273, 7
  %v275 = vsub.s32 0, %v274
  %v276 = vrot.slane %v271, %v275
  %v278 = vadd.f32 %v258, %v276
  %v279 = vadd.f32 %v261, %v276
  %v280 = vadd.f32 %v266, %v276
  %v281 = vmax.f32 %v278, 0.0
  %v282 = vmax.f32 %v279, 0.0
  %v283 = vmax.f32 %v280, 0.0
  %v284 = vpack.c.bf16 %v282, %v281
  %v285 = vpack.c.bf16 %v283, %v283
  %v288 = vunpack.c.l.b16 %v284
  %v289 = vunpack.c.h.b16 %v284
  %v290 = vunpack.c.l.b16 %v285
  %v291 = vpack.c.b16 %v288, %v288
  %v292 = vpack.c.b16 %v289, %v289
  %v293 = vpack.c.b16 %v290, %v290
  %297 = vst [vmem:[%s5] sm:$0xf] %v291
  %298 = vst [vmem:[%s5 + $0x4] sm:$0xf] %v292
  %299 = vst [vmem:[%s5 + $0x8] sm:$0xf] %v293
  // Predicated region
  $region22: #{sortpool_forward.5} parent=0 // pred_check
    _
  $region23: #{sortpool_forward.5} parent=0 // pred_check_branch
    %301 = sbr.rel (0) target = $region25
  $region24: #{sortpool_forward.5} parent=0 // pred_region
    _
  $region25: #{sortpool_forward.5} parent=0 // pred_fallthru
    _
  // Predicated region
  $region26: #{sortpool_forward.5} parent=0 // pred_check
    _
  $region27: #{sortpool_forward.5} parent=0 // pred_check_branch
    %303 = sbr.rel (0) target = $region29
  $region28: #{sortpool_forward.5} parent=0 // pred_region
    _
  $region29: #{sortpool_forward.5} parent=0 // pred_fallthru
    _

// kernel: sortpool_forward.4
$region0: #{sortpool_forward.4}
  #allocation0 [shape = 'u32[]', space=smem, size = 0x4, offset = 0x4, fixed_abs, tag = 'smem constant byte address 0x4 - core index']
  #allocation1 [shape = 'u32[144,128]{1,0:T(1,128)}', space=vmem, size = 0x12000, scoped, tag = 'internal scratch']
  %s0 = inlined_call_operand.vmem [shape: bf16[24,8], index: 0, kind: input, shape index: {}]
  %s1 = inlined_call_operand.vmem [shape: bf16[24,8], index: 1, kind: input, shape index: {}]
  %s2 = inlined_call_operand.vmem [shape: bf16[8,128], index: 2, kind: input, shape index: {}]
  %s3 = inlined_call_operand.vmem [shape: bf16[8,128], index: 3, kind: input, shape index: {}]
  %s4 = inlined_call_operand.vmem [shape: f32[1,128], index: 4, kind: input, shape index: {}]
  %s5 = inlined_call_operand.vmem [shape: bf16[24,128], index: 5, kind: output, shape index: {}]
  %s6 = sld [smem:[#allocation0]]
  $region30: #{sortpool_forward.4} parent=0
    _
  %s8 = ssub.s32 1, %s6
  %s9 = scalar_select 0, %s8, %s6
  // Predicated region
  $region2: #{sortpool_forward.4} parent=0 // pred_check
    _
  $region3: #{sortpool_forward.4} parent=0 // pred_check_branch
    %11 = sbr.rel (0) target = $region5
  $region4: #{sortpool_forward.4} parent=0 // pred_region
    _
  $region5: #{sortpool_forward.4} parent=0 // pred_fallthru
    _
  // Predicated region
  $region6: #{sortpool_forward.4} parent=0 // pred_check
    _
  $region7: #{sortpool_forward.4} parent=0 // pred_check_branch
    %13 = sbr.rel (0) target = $region9
  $region8: #{sortpool_forward.4} parent=0 // pred_region
    _
  $region9: #{sortpool_forward.4} parent=0 // pred_fallthru
    _
  // Predicated region
  $region10: #{sortpool_forward.4} parent=0 // pred_check
    _
  $region11: #{sortpool_forward.4} parent=0 // pred_check_branch
    %15 = sbr.rel (0) target = $region13
  $region12: #{sortpool_forward.4} parent=0 // pred_region
    _
  $region13: #{sortpool_forward.4} parent=0 // pred_fallthru
    _
  // Predicated region
  $region14: #{sortpool_forward.4} parent=0 // pred_check
    _
  $region15: #{sortpool_forward.4} parent=0 // pred_check_branch
    %17 = sbr.rel (0) target = $region17
  $region16: #{sortpool_forward.4} parent=0 // pred_region
    _
  $region17: #{sortpool_forward.4} parent=0 // pred_fallthru
    _
  // Predicated region
  $region18: #{sortpool_forward.4} parent=0 // pred_check
    _
  $region19: #{sortpool_forward.4} parent=0 // pred_check_branch
    %19 = sbr.rel (0) target = $region21
  $region20: #{sortpool_forward.4} parent=0 // pred_region
    _
  $region21: #{sortpool_forward.4} parent=0 // pred_fallthru
    _
  %v21 = vld [vmem:[%s0] sm:$0xf]
  %v22 = vld [vmem:[%s0 + $0x4] sm:$0xf]
  %v23 = vld [vmem:[%s0 + $0x8] sm:$0xf]
  %v24 = vld [vmem:[%s2] sm:$0xf]
  %v25 = vld [vmem:[%s1] sm:$0xf]
  %v26 = vld [vmem:[%s1 + $0x4] sm:$0xf]
  %v27 = vld [vmem:[%s1 + $0x8] sm:$0xf]
  %v28 = vld [vmem:[%s3] sm:$0xf]
  %v32 = vunpack.c.l.b16 %v25
  %v33 = vunpack.c.l.b16 %v26
  %v34 = vunpack.c.l.b16 %v27
  %v35 = vpack.c.b16 %v33, %v32
  %v36 = vpack.c.b16 %v34, %v34
  %vm37 = vcmask 64512
  %v39 = vsel %vm37, %v35, 0
  %v42 = vsel %vm37, %v36, 0
  %vm44 = vcmask 1043456
  %v46 = vsel %vm44, %v28, 0
  %48 = vmatprep.subr.bf16.mxu0 0
  %49 = vmatpush1.bf16.msra.mxu0 %v46
  %50 = vmatprep.subr.bf16.mxu0 0
  %51 = vmatpush1.bf16.msra.mxu0 0
  %52 = vmatprep.subr.bf16.mxu0 0
  %53 = vmatpush1.bf16.msra.mxu0 0
  %54 = vmatprep.subr.bf16.mxu0 0
  %55 = vmatpush1.bf16.msra.mxu0 0
  %56 = vmatprep.subr.bf16.mxu0 0
  %57 = vmatpush1.bf16.msra.mxu0 0
  %58 = vmatprep.subr.bf16.mxu0 0
  %59 = vmatpush1.bf16.msra.mxu0 0
  %60 = vmatprep.subr.bf16.mxu0 0
  %61 = vmatpush1.bf16.msra.mxu0 0
  %62 = vmatprep.subr.bf16.mxu0 0
  %63 = vmatpush1.bf16.msra.mxu0 0
  %64 = vmatprep.subr.bf16.mxu0 0
  %65 = vmatpush1.bf16.msra.mxu0 0
  %66 = vmatprep.subr.bf16.mxu0 0
  %67 = vmatpush1.bf16.msra.mxu0 0
  %68 = vmatprep.subr.bf16.mxu0 0
  %69 = vmatpush1.bf16.msra.mxu0 0
  %70 = vmatprep.subr.bf16.mxu0 0
  %71 = vmatpush1.bf16.msra.mxu0 0
  %72 = vmatprep.subr.bf16.mxu0 0
  %73 = vmatpush1.bf16.msra.mxu0 0
  %74 = vmatprep.subr.bf16.mxu0 0
  %75 = vmatpush1.bf16.msra.mxu0 0
  %76 = vmatprep.subr.bf16.mxu0 0
  %77 = vmatpush1.bf16.msra.mxu0 0
  %78 = vmatprep.subr.bf16.mxu0 0
  %79 = vmatpush1.bf16.msra.mxu0 0
  %80 = vmatprep.mubr.bf16.mxu0 0
  %81 = vmatmul.mubr.bf16.gmra.mrb[0].mxu0 %v39
  %v82 = vpop.f32.mrb[0].mxu0
  %v83 = vadd.f32 0.0, %v82
  %v84 = vpop.f32.mrb[0].mxu0
  %v85 = vpop.f32.mrb[0].mxu0
  %v86 = vadd.f32 0.0, %v85
  %v87 = vpop.f32.mrb[0].mxu0
  %88 = vmatprep.mubr.bf16.mxu0 0
  %89 = vmatmul.mubr.bf16.gmra.mrb[0].mxu0 %v42
  %v90 = vpop.f32.mrb[0].mxu0
  %v91 = vadd.f32 0.0, %v90
  %v92 = vpop.f32.mrb[0].mxu0
  %v93 = vpop.f32.mrb[0].mxu0
  %v94 = vpop.f32.mrb[0].mxu0
  %95 = vdwg.mxu0
  %v99 = vunpack.c.l.b16 %v21
  %v100 = vunpack.c.l.b16 %v22
  %v101 = vunpack.c.l.b16 %v23
  %v102 = vpack.c.b16 %v100, %v99
  %v103 = vpack.c.b16 %v101, %v101
  %v105 = vsel %vm37, %v102, 0
  %v108 = vsel %vm37, %v103, 0
  %v111 = vsel %vm44, %v24, 0
  %113 = vmatprep.subr.bf16.mxu0 0
  %114 = vmatpush1.bf16.msra.mxu0 %v111
  %115 = vmatprep.subr.bf16.mxu0 0
  %116 = vmatpush1.bf16.msra.mxu0 0
  %117 = vmatprep.subr.bf16.mxu0 0
  %118 = vmatpush1.bf16.msra.mxu0 0
  %119 = vmatprep.subr.bf16.mxu0 0
  %120 = vmatpush1.bf16.msra.mxu0 0
  %121 = vmatprep.subr.bf16.mxu0 0
  %122 = vmatpush1.bf16.msra.mxu0 0
  %123 = vmatprep.subr.bf16.mxu0 0
  %124 = vmatpush1.bf16.msra.mxu0 0
  %125 = vmatprep.subr.bf16.mxu0 0
  %126 = vmatpush1.bf16.msra.mxu0 0
  %127 = vmatprep.subr.bf16.mxu0 0
  %128 = vmatpush1.bf16.msra.mxu0 0
  %129 = vmatprep.subr.bf16.mxu0 0
  %130 = vmatpush1.bf16.msra.mxu0 0
  %131 = vmatprep.subr.bf16.mxu0 0
  %132 = vmatpush1.bf16.msra.mxu0 0
  %133 = vmatprep.subr.bf16.mxu0 0
  %134 = vmatpush1.bf16.msra.mxu0 0
  %135 = vmatprep.subr.bf16.mxu0 0
  %136 = vmatpush1.bf16.msra.mxu0 0
  %137 = vmatprep.subr.bf16.mxu0 0
  %138 = vmatpush1.bf16.msra.mxu0 0
  %139 = vmatprep.subr.bf16.mxu0 0
  %140 = vmatpush1.bf16.msra.mxu0 0
  %141 = vmatprep.subr.bf16.mxu0 0
  %142 = vmatpush1.bf16.msra.mxu0 0
  %143 = vmatprep.subr.bf16.mxu0 0
  %144 = vmatpush1.bf16.msra.mxu0 0
  %145 = vmatprep.mubr.bf16.mxu0 0
  %146 = vmatmul.mubr.bf16.gmra.mrb[0].mxu0 %v105
  %v147 = vpop.f32.mrb[0].mxu0
  %v148 = vadd.f32 %v83, %v147
  %v149 = vpop.f32.mrb[0].mxu0
  %v150 = vpop.f32.mrb[0].mxu0
  %v151 = vadd.f32 %v86, %v150
  %v152 = vpop.f32.mrb[0].mxu0
  %153 = vmatprep.mubr.bf16.mxu0 0
  %154 = vmatmul.mubr.bf16.gmra.mrb[0].mxu0 %v108
  %v155 = vpop.f32.mrb[0].mxu0
  %v156 = vadd.f32 %v91, %v155
  %v157 = vpop.f32.mrb[0].mxu0
  %v158 = vpop.f32.mrb[0].mxu0
  %v159 = vpop.f32.mrb[0].mxu0
  %160 = vdwg.mxu0
  %v161 = vld [vmem:[%s4] sm:$0x1]
  %v163 = vlaneseq
  %v164 = vshrl.u32 %v163, 7
  %v165 = vsub.s32 0, %v164
  %v166 = vrot.slane %v161, %v165
  %v168 = vadd.f32 %v148, %v166
  %v169 = vadd.f32 %v151, %v166
  %v170 = vadd.f32 %v156, %v166
  %v171 = vmax.f32 %v168, 0.0
  %v172 = vmax.f32 %v169, 0.0
  %v173 = vmax.f32 %v170, 0.0
  %v174 = vpack.c.bf16 %v172, %v171
  %v175 = vpack.c.bf16 %v173, %v173
  %v178 = vunpack.c.l.b16 %v174
  %v179 = vunpack.c.h.b16 %v174
  %v180 = vunpack.c.l.b16 %v175
  %v181 = vpack.c.b16 %v178, %v178
  %v182 = vpack.c.b16 %v179, %v179
  %v183 = vpack.c.b16 %v180, %v180
  %187 = vst [vmem:[%s5] sm:$0xf] %v181
  %188 = vst [vmem:[%s5 + $0x4] sm:$0xf] %v182
  %189 = vst [vmem:[%s5 + $0x8] sm:$0xf] %v183
  // Predicated region
  $region22: #{sortpool_forward.4} parent=0 // pred_check
    _
  $region23: #{sortpool_forward.4} parent=0 // pred_check_branch
    %191 = sbr.rel (0) target = $region25
  $region24: #{sortpool_forward.4} parent=0 // pred_region
    _
  $region25: #{sortpool_forward.4} parent=0 // pred_fallthru
    _
  // Predicated region
  $region26: #{sortpool_forward.4} parent=0 // pred_check
    _
  $region27: #{sortpool_forward.4} parent=0 // pred_check_branch
    %193 = sbr.rel (0) target = $region29
  $region28: #{sortpool_forward.4} parent=0 // pred_region
    _
  $region29: #{sortpool_forward.4} parent=0 // pred_fallthru
    _

// kernel: sortpool_forward.7
$region0: #{sortpool_forward.7}
  #allocation0 [shape = 'u32[]', space=smem, size = 0x4, offset = 0x4, fixed_abs, tag = 'smem constant byte address 0x4 - core index']
  #allocation1 [shape = 'u32[144,128]{1,0:T(1,128)}', space=vmem, size = 0x12000, scoped, tag = 'internal scratch']
  %s0 = inlined_call_operand.vmem [shape: bf16[8,768], index: 0, kind: input, shape index: {}]
  %s1 = inlined_call_operand.vmem [shape: bf16[768,128], index: 1, kind: input, shape index: {}]
  %s2 = inlined_call_operand.vmem [shape: f32[1,128], index: 2, kind: input, shape index: {}]
  %s3 = inlined_call_operand.vmem [shape: bf16[128,32], index: 3, kind: input, shape index: {}]
  %s4 = inlined_call_operand.vmem [shape: f32[1,32], index: 4, kind: input, shape index: {}]
  %s5 = inlined_call_operand.vmem [shape: bf16[32,128], index: 5, kind: input, shape index: {}]
  %s6 = inlined_call_operand.vmem [shape: f32[1,128], index: 6, kind: input, shape index: {}]
  %s7 = inlined_call_operand.vmem [shape: f32[8,128], index: 7, kind: output, shape index: {}]
  %s8 = sld [smem:[#allocation0]]
  $region38: #{sortpool_forward.7} parent=0
    _
  %s10 = ssub.s32 1, %s8
  %s11 = scalar_select 0, %s10, %s8
  // Predicated region
  $region2: #{sortpool_forward.7} parent=0 // pred_check
    _
  $region3: #{sortpool_forward.7} parent=0 // pred_check_branch
    %13 = sbr.rel (0) target = $region5
  $region4: #{sortpool_forward.7} parent=0 // pred_region
    _
  $region5: #{sortpool_forward.7} parent=0 // pred_fallthru
    _
  // Predicated region
  $region6: #{sortpool_forward.7} parent=0 // pred_check
    _
  $region7: #{sortpool_forward.7} parent=0 // pred_check_branch
    %15 = sbr.rel (0) target = $region9
  $region8: #{sortpool_forward.7} parent=0 // pred_region
    _
  $region9: #{sortpool_forward.7} parent=0 // pred_fallthru
    _
  // Predicated region
  $region10: #{sortpool_forward.7} parent=0 // pred_check
    _
  $region11: #{sortpool_forward.7} parent=0 // pred_check_branch
    %17 = sbr.rel (0) target = $region13
  $region12: #{sortpool_forward.7} parent=0 // pred_region
    _
  $region13: #{sortpool_forward.7} parent=0 // pred_fallthru
    _
  // Predicated region
  $region14: #{sortpool_forward.7} parent=0 // pred_check
    _
  $region15: #{sortpool_forward.7} parent=0 // pred_check_branch
    %19 = sbr.rel (0) target = $region17
  $region16: #{sortpool_forward.7} parent=0 // pred_region
    _
  $region17: #{sortpool_forward.7} parent=0 // pred_fallthru
    _
  // Predicated region
  $region18: #{sortpool_forward.7} parent=0 // pred_check
    _
  $region19: #{sortpool_forward.7} parent=0 // pred_check_branch
    %21 = sbr.rel (0) target = $region21
  $region20: #{sortpool_forward.7} parent=0 // pred_region
    _
  $region21: #{sortpool_forward.7} parent=0 // pred_fallthru
    _
  // Predicated region
  $region22: #{sortpool_forward.7} parent=0 // pred_check
    _
  $region23: #{sortpool_forward.7} parent=0 // pred_check_branch
    %23 = sbr.rel (0) target = $region25
  $region24: #{sortpool_forward.7} parent=0 // pred_region
    _
  $region25: #{sortpool_forward.7} parent=0 // pred_fallthru
    _
  // Predicated region
  $region26: #{sortpool_forward.7} parent=0 // pred_check
    _
  $region27: #{sortpool_forward.7} parent=0 // pred_check_branch
    %25 = sbr.rel (0) target = $region29
  $region28: #{sortpool_forward.7} parent=0 // pred_region
    _
  $region29: #{sortpool_forward.7} parent=0 // pred_fallthru
    _
  %v27 = vld [vmem:[%s0] sm:$0xff]
  %v28 = vld [vmem:[%s0 + $0x8] sm:$0xff]
  %v29 = vld [vmem:[%s0 + $0x10] sm:$0xff]
  %v30 = vld [vmem:[%s1] sm:$0xf]
  %v31 = vld [vmem:[%s1 + $0x4] sm:$0xf]
  %v32 = vld [vmem:[%s1 + $0x8] sm:$0xf]
  %v33 = vld [vmem:[%s1 + $0xc] sm:$0xf]
  %v34 = vld [vmem:[%s1 + $0x10] sm:$0xf]
  %v35 = vld [vmem:[%s1 + $0x14] sm:$0xf]
  %v36 = vld [vmem:[%s1 + $0x18] sm:$0xf]
  %v37 = vld [vmem:[%s1 + $0x1c] sm:$0xf]
  %v38 = vld [vmem:[%s1 + $0x20] sm:$0xf]
  %v39 = vld [vmem:[%s1 + $0x24] sm:$0xf]
  %v40 = vld [vmem:[%s1 + $0x28] sm:$0xf]
  %v41 = vld [vmem:[%s1 + $0x2c] sm:$0xf]
  %v42 = vld [vmem:[%s1 + $0x30] sm:$0xf]
  %v43 = vld [vmem:[%s1 + $0x34] sm:$0xf]
  %v44 = vld [vmem:[%s1 + $0x38] sm:$0xf]
  %v45 = vld [vmem:[%s1 + $0x3c] sm:$0xf]
  %v46 = vld [vmem:[%s1 + $0x40] sm:$0xf]
  %v47 = vld [vmem:[%s1 + $0x44] sm:$0xf]
  %v48 = vld [vmem:[%s1 + $0x48] sm:$0xf]
  %v49 = vld [vmem:[%s1 + $0x4c] sm:$0xf]
  %v50 = vld [vmem:[%s1 + $0x50] sm:$0xf]
  %v51 = vld [vmem:[%s1 + $0x54] sm:$0xf]
  %v52 = vld [vmem:[%s1 + $0x58] sm:$0xf]
  %v53 = vld [vmem:[%s1 + $0x5c] sm:$0xf]
  %v54 = vld [vmem:[%s1 + $0x60] sm:$0xf]
  %v55 = vld [vmem:[%s1 + $0x64] sm:$0xf]
  %v56 = vld [vmem:[%s1 + $0x68] sm:$0xf]
  %v57 = vld [vmem:[%s1 + $0x6c] sm:$0xf]
  %v58 = vld [vmem:[%s1 + $0x70] sm:$0xf]
  %v59 = vld [vmem:[%s1 + $0x74] sm:$0xf]
  %v60 = vld [vmem:[%s1 + $0x78] sm:$0xf]
  %v61 = vld [vmem:[%s1 + $0x7c] sm:$0xf]
  %v62 = vld [vmem:[%s1 + $0x80] sm:$0xf]
  %v63 = vld [vmem:[%s1 + $0x84] sm:$0xf]
  %v64 = vld [vmem:[%s1 + $0x88] sm:$0xf]
  %v65 = vld [vmem:[%s1 + $0x8c] sm:$0xf]
  %v66 = vld [vmem:[%s1 + $0x90] sm:$0xf]
  %v67 = vld [vmem:[%s1 + $0x94] sm:$0xf]
  %v68 = vld [vmem:[%s1 + $0x98] sm:$0xf]
  %v69 = vld [vmem:[%s1 + $0x9c] sm:$0xf]
  %v70 = vld [vmem:[%s1 + $0xa0] sm:$0xf]
  %v71 = vld [vmem:[%s1 + $0xa4] sm:$0xf]
  %v72 = vld [vmem:[%s1 + $0xa8] sm:$0xf]
  %v73 = vld [vmem:[%s1 + $0xac] sm:$0xf]
  %v74 = vld [vmem:[%s1 + $0xb0] sm:$0xf]
  %v75 = vld [vmem:[%s1 + $0xb4] sm:$0xf]
  %v76 = vld [vmem:[%s1 + $0xb8] sm:$0xf]
  %v77 = vld [vmem:[%s1 + $0xbc] sm:$0xf]
  %v78 = vld [vmem:[%s1 + $0xc0] sm:$0xf]
  %v79 = vld [vmem:[%s1 + $0xc4] sm:$0xf]
  %v80 = vld [vmem:[%s1 + $0xc8] sm:$0xf]
  %v81 = vld [vmem:[%s1 + $0xcc] sm:$0xf]
  %v82 = vld [vmem:[%s1 + $0xd0] sm:$0xf]
  %v83 = vld [vmem:[%s1 + $0xd4] sm:$0xf]
  %v84 = vld [vmem:[%s1 + $0xd8] sm:$0xf]
  %v85 = vld [vmem:[%s1 + $0xdc] sm:$0xf]
  %v86 = vld [vmem:[%s1 + $0xe0] sm:$0xf]
  %v87 = vld [vmem:[%s1 + $0xe4] sm:$0xf]
  %v88 = vld [vmem:[%s1 + $0xe8] sm:$0xf]
  %v89 = vld [vmem:[%s1 + $0xec] sm:$0xf]
  %v90 = vld [vmem:[%s1 + $0xf0] sm:$0xf]
  %v91 = vld [vmem:[%s1 + $0xf4] sm:$0xf]
  %v92 = vld [vmem:[%s1 + $0xf8] sm:$0xf]
  %v93 = vld [vmem:[%s1 + $0xfc] sm:$0xf]
  %v94 = vld [vmem:[%s1 + $0x100] sm:$0xf]
  %v95 = vld [vmem:[%s1 + $0x104] sm:$0xf]
  %v96 = vld [vmem:[%s1 + $0x108] sm:$0xf]
  %v97 = vld [vmem:[%s1 + $0x10c] sm:$0xf]
  %v98 = vld [vmem:[%s1 + $0x110] sm:$0xf]
  %v99 = vld [vmem:[%s1 + $0x114] sm:$0xf]
  %v100 = vld [vmem:[%s1 + $0x118] sm:$0xf]
  %v101 = vld [vmem:[%s1 + $0x11c] sm:$0xf]
  %v102 = vld [vmem:[%s1 + $0x120] sm:$0xf]
  %v103 = vld [vmem:[%s1 + $0x124] sm:$0xf]
  %v104 = vld [vmem:[%s1 + $0x128] sm:$0xf]
  %v105 = vld [vmem:[%s1 + $0x12c] sm:$0xf]
  %v106 = vld [vmem:[%s1 + $0x130] sm:$0xf]
  %v107 = vld [vmem:[%s1 + $0x134] sm:$0xf]
  %v108 = vld [vmem:[%s1 + $0x138] sm:$0xf]
  %v109 = vld [vmem:[%s1 + $0x13c] sm:$0xf]
  %v110 = vld [vmem:[%s1 + $0x140] sm:$0xf]
  %v111 = vld [vmem:[%s1 + $0x144] sm:$0xf]
  %v112 = vld [vmem:[%s1 + $0x148] sm:$0xf]
  %v113 = vld [vmem:[%s1 + $0x14c] sm:$0xf]
  %v114 = vld [vmem:[%s1 + $0x150] sm:$0xf]
  %v115 = vld [vmem:[%s1 + $0x154] sm:$0xf]
  %v116 = vld [vmem:[%s1 + $0x158] sm:$0xf]
  %v117 = vld [vmem:[%s1 + $0x15c] sm:$0xf]
  %v118 = vld [vmem:[%s1 + $0x160] sm:$0xf]
  %v119 = vld [vmem:[%s1 + $0x164] sm:$0xf]
  %v120 = vld [vmem:[%s1 + $0x168] sm:$0xf]
  %v121 = vld [vmem:[%s1 + $0x16c] sm:$0xf]
  %v122 = vld [vmem:[%s1 + $0x170] sm:$0xf]
  %v123 = vld [vmem:[%s1 + $0x174] sm:$0xf]
  %v124 = vld [vmem:[%s1 + $0x178] sm:$0xf]
  %v125 = vld [vmem:[%s1 + $0x17c] sm:$0xf]
  %v126 = vld [vmem:[%s2] sm:$0x1]
  %v128 = vlaneseq
  %v129 = vshrl.u32 %v128, 7
  %v130 = vsub.s32 0, %v129
  %v131 = vrot.slane %v126, %v130
  %v136 = vunpack.c.l.b16 %v27
  %v137 = vunpack.c.h.b16 %v27
  %v138 = vunpack.c.l.b16 %v28
  %v139 = vunpack.c.h.b16 %v28
  %v140 = vunpack.c.l.b16 %v29
  %v141 = vunpack.c.h.b16 %v29
  %v142 = vpack.c.b16 %v136, %v136
  %v143 = vpack.c.b16 %v137, %v137
  %v144 = vpack.c.b16 %v138, %v138
  %v145 = vpack.c.b16 %v139, %v139
  %v146 = vpack.c.b16 %v140, %v140
  %v147 = vpack.c.b16 %v141, %v141
  %v250 = vunpack.c.l.b16 %v30
  %v251 = vunpack.c.l.b16 %v31
  %v252 = vunpack.c.l.b16 %v32
  %v253 = vunpack.c.l.b16 %v33
  %v254 = vunpack.c.l.b16 %v34
  %v255 = vunpack.c.l.b16 %v35
  %v256 = vunpack.c.l.b16 %v36
  %v257 = vunpack.c.l.b16 %v37
  %v258 = vunpack.c.l.b16 %v38
  %v259 = vunpack.c.l.b16 %v39
  %v260 = vunpack.c.l.b16 %v40
  %v261 = vunpack.c.l.b16 %v41
  %v262 = vunpack.c.l.b16 %v42
  %v263 = vunpack.c.l.b16 %v43
  %v264 = vunpack.c.l.b16 %v44
  %v265 = vunpack.c.l.b16 %v45
  %v266 = vunpack.c.l.b16 %v46
  %v267 = vunpack.c.l.b16 %v47
  %v268 = vunpack.c.l.b16 %v48
  %v269 = vunpack.c.l.b16 %v49
  %v270 = vunpack.c.l.b16 %v50
  %v271 = vunpack.c.l.b16 %v51
  %v272 = vunpack.c.l.b16 %v52
  %v273 = vunpack.c.l.b16 %v53
  %v274 = vunpack.c.l.b16 %v54
  %v275 = vunpack.c.l.b16 %v55
  %v276 = vunpack.c.l.b16 %v56
  %v277 = vunpack.c.l.b16 %v57
  %v278 = vunpack.c.l.b16 %v58
  %v279 = vunpack.c.l.b16 %v59
  %v280 = vunpack.c.l.b16 %v60
  %v281 = vunpack.c.l.b16 %v61
  %v282 = vunpack.c.l.b16 %v62
  %v283 = vunpack.c.l.b16 %v63
  %v284 = vunpack.c.l.b16 %v64
  %v285 = vunpack.c.l.b16 %v65
  %v286 = vunpack.c.l.b16 %v66
  %v287 = vunpack.c.l.b16 %v67
  %v288 = vunpack.c.l.b16 %v68
  %v289 = vunpack.c.l.b16 %v69
  %v290 = vunpack.c.l.b16 %v70
  %v291 = vunpack.c.l.b16 %v71
  %v292 = vunpack.c.l.b16 %v72
  %v293 = vunpack.c.l.b16 %v73
  %v294 = vunpack.c.l.b16 %v74
  %v295 = vunpack.c.l.b16 %v75
  %v296 = vunpack.c.l.b16 %v76
  %v297 = vunpack.c.l.b16 %v77
  %v298 = vunpack.c.l.b16 %v78
  %v299 = vunpack.c.l.b16 %v79
  %v300 = vunpack.c.l.b16 %v80
  %v301 = vunpack.c.l.b16 %v81
  %v302 = vunpack.c.l.b16 %v82
  %v303 = vunpack.c.l.b16 %v83
  %v304 = vunpack.c.l.b16 %v84
  %v305 = vunpack.c.l.b16 %v85
  %v306 = vunpack.c.l.b16 %v86
  %v307 = vunpack.c.l.b16 %v87
  %v308 = vunpack.c.l.b16 %v88
  %v309 = vunpack.c.l.b16 %v89
  %v310 = vunpack.c.l.b16 %v90
  %v311 = vunpack.c.l.b16 %v91
  %v312 = vunpack.c.l.b16 %v92
  %v313 = vunpack.c.l.b16 %v93
  %v314 = vunpack.c.l.b16 %v94
  %v315 = vunpack.c.l.b16 %v95
  %v316 = vunpack.c.l.b16 %v96
  %v317 = vunpack.c.l.b16 %v97
  %v318 = vunpack.c.l.b16 %v98
  %v319 = vunpack.c.l.b16 %v99
  %v320 = vunpack.c.l.b16 %v100
  %v321 = vunpack.c.l.b16 %v101
  %v322 = vunpack.c.l.b16 %v102
  %v323 = vunpack.c.l.b16 %v103
  %v324 = vunpack.c.l.b16 %v104
  %v325 = vunpack.c.l.b16 %v105
  %v326 = vunpack.c.l.b16 %v106
  %v327 = vunpack.c.l.b16 %v107
  %v328 = vunpack.c.l.b16 %v108
  %v329 = vunpack.c.l.b16 %v109
  %v330 = vunpack.c.l.b16 %v110
  %v331 = vunpack.c.l.b16 %v111
  %v332 = vunpack.c.l.b16 %v112
  %v333 = vunpack.c.l.b16 %v113
  %v334 = vunpack.c.l.b16 %v114
  %v335 = vunpack.c.l.b16 %v115
  %v336 = vunpack.c.l.b16 %v116
  %v337 = vunpack.c.l.b16 %v117
  %v338 = vunpack.c.l.b16 %v118
  %v339 = vunpack.c.l.b16 %v119
  %v340 = vunpack.c.l.b16 %v120
  %v341 = vunpack.c.l.b16 %v121
  %v342 = vunpack.c.l.b16 %v122
  %v343 = vunpack.c.l.b16 %v123
  %v344 = vunpack.c.l.b16 %v124
  %v345 = vunpack.c.l.b16 %v125
  %v346 = vpack.c.b16 %v251, %v250
  %v347 = vpack.c.b16 %v253, %v252
  %v348 = vpack.c.b16 %v255, %v254
  %v349 = vpack.c.b16 %v257, %v256
  %v350 = vpack.c.b16 %v259, %v258
  %v351 = vpack.c.b16 %v261, %v260
  %v352 = vpack.c.b16 %v263, %v262
  %v353 = vpack.c.b16 %v265, %v264
  %v354 = vpack.c.b16 %v267, %v266
  %v355 = vpack.c.b16 %v269, %v268
  %v356 = vpack.c.b16 %v271, %v270
  %v357 = vpack.c.b16 %v273, %v272
  %v358 = vpack.c.b16 %v275, %v274
  %v359 = vpack.c.b16 %v277, %v276
  %v360 = vpack.c.b16 %v279, %v278
  %v361 = vpack.c.b16 %v281, %v280
  %v362 = vpack.c.b16 %v283, %v282
  %v363 = vpack.c.b16 %v285, %v284
  %v364 = vpack.c.b16 %v287, %v286
  %v365 = vpack.c.b16 %v289, %v288
  %v366 = vpack.c.b16 %v291, %v290
  %v367 = vpack.c.b16 %v293, %v292
  %v368 = vpack.c.b16 %v295, %v294
  %v369 = vpack.c.b16 %v297, %v296
  %v370 = vpack.c.b16 %v299, %v298
  %v371 = vpack.c.b16 %v301, %v300
  %v372 = vpack.c.b16 %v303, %v302
  %v373 = vpack.c.b16 %v305, %v304
  %v374 = vpack.c.b16 %v307, %v306
  %v375 = vpack.c.b16 %v309, %v308
  %v376 = vpack.c.b16 %v311, %v310
  %v377 = vpack.c.b16 %v313, %v312
  %v378 = vpack.c.b16 %v315, %v314
  %v379 = vpack.c.b16 %v317, %v316
  %v380 = vpack.c.b16 %v319, %v318
  %v381 = vpack.c.b16 %v321, %v320
  %v382 = vpack.c.b16 %v323, %v322
  %v383 = vpack.c.b16 %v325, %v324
  %v384 = vpack.c.b16 %v327, %v326
  %v385 = vpack.c.b16 %v329, %v328
  %v386 = vpack.c.b16 %v331, %v330
  %v387 = vpack.c.b16 %v333, %v332
  %v388 = vpack.c.b16 %v335, %v334
  %v389 = vpack.c.b16 %v337, %v336
  %v390 = vpack.c.b16 %v339, %v338
  %v391 = vpack.c.b16 %v341, %v340
  %v392 = vpack.c.b16 %v343, %v342
  %v393 = vpack.c.b16 %v345, %v344
  %442 = vmatprep.subr.bf16.mxu0 0
  %443 = vmatpush1.bf16.msra.mxu0 %v346
  %444 = vmatprep.subr.bf16.mxu0 0
  %445 = vmatpush1.bf16.msra.mxu0 %v347
  %446 = vmatprep.subr.bf16.mxu0 0
  %447 = vmatpush1.bf16.msra.mxu0 %v348
  %448 = vmatprep.subr.bf16.mxu0 0
  %449 = vmatpush1.bf16.msra.mxu0 %v349
  %450 = vmatprep.subr.bf16.mxu0 0
  %451 = vmatpush1.bf16.msra.mxu0 %v350
  %452 = vmatprep.subr.bf16.mxu0 0
  %453 = vmatpush1.bf16.msra.mxu0 %v351
  %454 = vmatprep.subr.bf16.mxu0 0
  %455 = vmatpush1.bf16.msra.mxu0 %v352
  %456 = vmatprep.subr.bf16.mxu0 0
  %457 = vmatpush1.bf16.msra.mxu0 %v353
  %458 = vmatprep.subr.bf16.mxu0 0
  %459 = vmatpush1.bf16.msra.mxu0 %v354
  %460 = vmatprep.subr.bf16.mxu0 0
  %461 = vmatpush1.bf16.msra.mxu0 %v355
  %462 = vmatprep.subr.bf16.mxu0 0
  %463 = vmatpush1.bf16.msra.mxu0 %v356
  %464 = vmatprep.subr.bf16.mxu0 0
  %465 = vmatpush1.bf16.msra.mxu0 %v357
  %466 = vmatprep.subr.bf16.mxu0 0
  %467 = vmatpush1.bf16.msra.mxu0 %v358
  %468 = vmatprep.subr.bf16.mxu0 0
  %469 = vmatpush1.bf16.msra.mxu0 %v359
  %470 = vmatprep.subr.bf16.mxu0 0
  %471 = vmatpush1.bf16.msra.mxu0 %v360
  %472 = vmatprep.subr.bf16.mxu0 0
  %473 = vmatpush1.bf16.msra.mxu0 %v361
  %474 = vmatprep.mubr.bf16.mxu0 %v143
  %475 = vmatmul.mubr.bf16.gmra.mrb[0].mxu0 %v142
  %v476 = vpop.f32.mrb[0].mxu0
  %v477 = vadd.f32 %v131, %v476
  %v478 = vpop.f32.mrb[0].mxu0
  %v479 = vpop.f32.mrb[0].mxu0
  %v480 = vpop.f32.mrb[0].mxu0
  %481 = vdwg.mxu0
  %482 = vmatprep.subr.bf16.mxu0 0
  %483 = vmatpush1.bf16.msra.mxu0 %v362
  %484 = vmatprep.subr.bf16.mxu0 0
  %485 = vmatpush1.bf16.msra.mxu0 %v363
  %486 = vmatprep.subr.bf16.mxu0 0
  %487 = vmatpush1.bf16.msra.mxu0 %v364
  %488 = vmatprep.subr.bf16.mxu0 0
  %489 = vmatpush1.bf16.msra.mxu0 %v365
  %490 = vmatprep.subr.bf16.mxu0 0
  %491 = vmatpush1.bf16.msra.mxu0 %v366
  %492 = vmatprep.subr.bf16.mxu0 0
  %493 = vmatpush1.bf16.msra.mxu0 %v367
  %494 = vmatprep.subr.bf16.mxu0 0
  %495 = vmatpush1.bf16.msra.mxu0 %v368
  %496 = vmatprep.subr.bf16.mxu0 0
  %497 = vmatpush1.bf16.msra.mxu0 %v369
  %498 = vmatprep.subr.bf16.mxu0 0
  %499 = vmatpush1.bf16.msra.mxu0 %v370
  %500 = vmatprep.subr.bf16.mxu0 0
  %501 = vmatpush1.bf16.msra.mxu0 %v371
  %502 = vmatprep.subr.bf16.mxu0 0
  %503 = vmatpush1.bf16.msra.mxu0 %v372
  %504 = vmatprep.subr.bf16.mxu0 0
  %505 = vmatpush1.bf16.msra.mxu0 %v373
  %506 = vmatprep.subr.bf16.mxu0 0
  %507 = vmatpush1.bf16.msra.mxu0 %v374
  %508 = vmatprep.subr.bf16.mxu0 0
  %509 = vmatpush1.bf16.msra.mxu0 %v375
  %510 = vmatprep.subr.bf16.mxu0 0
  %511 = vmatpush1.bf16.msra.mxu0 %v376
  %512 = vmatprep.subr.bf16.mxu0 0
  %513 = vmatpush1.bf16.msra.mxu0 %v377
  %514 = vmatprep.mubr.bf16.mxu0 %v145
  %515 = vmatmul.mubr.bf16.gmra.mrb[0].mxu0 %v144
  %v516 = vpop.f32.mrb[0].mxu0
  %v517 = vadd.f32 %v477, %v516
  %v518 = vpop.f32.mrb[0].mxu0
  %v519 = vpop.f32.mrb[0].mxu0
  %v520 = vpop.f32.mrb[0].mxu0
  %521 = vdwg.mxu0
  %522 = vmatprep.subr.bf16.mxu0 0
  %523 = vmatpush1.bf16.msra.mxu0 %v378
  %524 = vmatprep.subr.bf16.mxu0 0
  %525 = vmatpush1.bf16.msra.mxu0 %v379
  %526 = vmatprep.subr.bf16.mxu0 0
  %527 = vmatpush1.bf16.msra.mxu0 %v380
  %528 = vmatprep.subr.bf16.mxu0 0
  %529 = vmatpush1.bf16.msra.mxu0 %v381
  %530 = vmatprep.subr.bf16.mxu0 0
  %531 = vmatpush1.bf16.msra.mxu0 %v382
  %532 = vmatprep.subr.bf16.mxu0 0
  %533 = vmatpush1.bf16.msra.mxu0 %v383
  %534 = vmatprep.subr.bf16.mxu0 0
  %535 = vmatpush1.bf16.msra.mxu0 %v384
  %536 = vmatprep.subr.bf16.mxu0 0
  %537 = vmatpush1.bf16.msra.mxu0 %v385
  %538 = vmatprep.subr.bf16.mxu0 0
  %539 = vmatpush1.bf16.msra.mxu0 %v386
  %540 = vmatprep.subr.bf16.mxu0 0
  %541 = vmatpush1.bf16.msra.mxu0 %v387
  %542 = vmatprep.subr.bf16.mxu0 0
  %543 = vmatpush1.bf16.msra.mxu0 %v388
  %544 = vmatprep.subr.bf16.mxu0 0
  %545 = vmatpush1.bf16.msra.mxu0 %v389
  %546 = vmatprep.subr.bf16.mxu0 0
  %547 = vmatpush1.bf16.msra.mxu0 %v390
  %548 = vmatprep.subr.bf16.mxu0 0
  %549 = vmatpush1.bf16.msra.mxu0 %v391
  %550 = vmatprep.subr.bf16.mxu0 0
  %551 = vmatpush1.bf16.msra.mxu0 %v392
  %552 = vmatprep.subr.bf16.mxu0 0
  %553 = vmatpush1.bf16.msra.mxu0 %v393
  %554 = vmatprep.mubr.bf16.mxu0 %v147
  %555 = vmatmul.mubr.bf16.gmra.mrb[0].mxu0 %v146
  %v556 = vpop.f32.mrb[0].mxu0
  %v557 = vadd.f32 %v517, %v556
  %v558 = vpop.f32.mrb[0].mxu0
  %v559 = vpop.f32.mrb[0].mxu0
  %v560 = vpop.f32.mrb[0].mxu0
  %561 = vdwg.mxu0
  %v562 = vmax.f32 %v557, 0.0
  %v563 = vpack.c.bf16 %v562, %v562
  %v564 = vld [vmem:[%s3] sm:$0xf]
  %v565 = vld [vmem:[%s3 + $0x4] sm:$0xf]
  %v566 = vld [vmem:[%s3 + $0x8] sm:$0xf]
  %v567 = vld [vmem:[%s3 + $0xc] sm:$0xf]
  %v568 = vld [vmem:[%s3 + $0x10] sm:$0xf]
  %v569 = vld [vmem:[%s3 + $0x14] sm:$0xf]
  %v570 = vld [vmem:[%s3 + $0x18] sm:$0xf]
  %v571 = vld [vmem:[%s3 + $0x1c] sm:$0xf]
  %v572 = vld [vmem:[%s3 + $0x20] sm:$0xf]
  %v573 = vld [vmem:[%s3 + $0x24] sm:$0xf]
  %v574 = vld [vmem:[%s3 + $0x28] sm:$0xf]
  %v575 = vld [vmem:[%s3 + $0x2c] sm:$0xf]
  %v576 = vld [vmem:[%s3 + $0x30] sm:$0xf]
  %v577 = vld [vmem:[%s3 + $0x34] sm:$0xf]
  %v578 = vld [vmem:[%s3 + $0x38] sm:$0xf]
  %v579 = vld [vmem:[%s3 + $0x3c] sm:$0xf]
  %v580 = vld [vmem:[%s4] sm:$0x1]
  %v582 = vlaneseq
  %v583 = vshrl.u32 %v582, 7
  %v584 = vsub.s32 0, %v583
  %v585 = vrot.slane %v580, %v584
  %v603 = vunpack.c.l.b16 %v564
  %v604 = vunpack.c.l.b16 %v565
  %v605 = vunpack.c.l.b16 %v566
  %v606 = vunpack.c.l.b16 %v567
  %v607 = vunpack.c.l.b16 %v568
  %v608 = vunpack.c.l.b16 %v569
  %v609 = vunpack.c.l.b16 %v570
  %v610 = vunpack.c.l.b16 %v571
  %v611 = vunpack.c.l.b16 %v572
  %v612 = vunpack.c.l.b16 %v573
  %v613 = vunpack.c.l.b16 %v574
  %v614 = vunpack.c.l.b16 %v575
  %v615 = vunpack.c.l.b16 %v576
  %v616 = vunpack.c.l.b16 %v577
  %v617 = vunpack.c.l.b16 %v578
  %v618 = vunpack.c.l.b16 %v579
  %v619 = vpack.c.b16 %v604, %v603
  %v620 = vpack.c.b16 %v606, %v605
  %v621 = vpack.c.b16 %v608, %v607
  %v622 = vpack.c.b16 %v610, %v609
  %v623 = vpack.c.b16 %v612, %v611
  %v624 = vpack.c.b16 %v614, %v613
  %v625 = vpack.c.b16 %v616, %v615
  %v626 = vpack.c.b16 %v618, %v617
  %635 = vmatprep.subr.bf16.mxu0 0
  %636 = vmatpush1.bf16.msra.mxu0 %v619
  %637 = vmatprep.subr.bf16.mxu0 0
  %638 = vmatpush1.bf16.msra.mxu0 %v620
  %639 = vmatprep.subr.bf16.mxu0 0
  %640 = vmatpush1.bf16.msra.mxu0 %v621
  %641 = vmatprep.subr.bf16.mxu0 0
  %642 = vmatpush1.bf16.msra.mxu0 %v622
  %643 = vmatprep.subr.bf16.mxu0 0
  %644 = vmatpush1.bf16.msra.mxu0 %v623
  %645 = vmatprep.subr.bf16.mxu0 0
  %646 = vmatpush1.bf16.msra.mxu0 %v624
  %647 = vmatprep.subr.bf16.mxu0 0
  %648 = vmatpush1.bf16.msra.mxu0 %v625
  %649 = vmatprep.subr.bf16.mxu0 0
  %650 = vmatpush1.bf16.msra.mxu0 %v626
  %651 = vmatprep.subr.bf16.mxu0 0
  %652 = vmatpush1.bf16.msra.mxu0 0
  %653 = vmatprep.subr.bf16.mxu0 0
  %654 = vmatpush1.bf16.msra.mxu0 0
  %655 = vmatprep.subr.bf16.mxu0 0
  %656 = vmatpush1.bf16.msra.mxu0 0
  %657 = vmatprep.subr.bf16.mxu0 0
  %658 = vmatpush1.bf16.msra.mxu0 0
  %659 = vmatprep.subr.bf16.mxu0 0
  %660 = vmatpush1.bf16.msra.mxu0 0
  %661 = vmatprep.subr.bf16.mxu0 0
  %662 = vmatpush1.bf16.msra.mxu0 0
  %663 = vmatprep.subr.bf16.mxu0 0
  %664 = vmatpush1.bf16.msra.mxu0 0
  %665 = vmatprep.subr.bf16.mxu0 0
  %666 = vmatpush1.bf16.msra.mxu0 0
  %667 = vmatprep.mubr.bf16.mxu0 0
  %668 = vmatmul.mubr.bf16.gmra.mrb[0].mxu0 %v563
  %v669 = vpop.f32.mrb[0].mxu0
  %v670 = vadd.f32 %v585, %v669
  %v671 = vpop.f32.mrb[0].mxu0
  %v672 = vpop.f32.mrb[0].mxu0
  %v673 = vpop.f32.mrb[0].mxu0
  %674 = vdwg.mxu0
  %v675 = vmax.f32 %v670, 0.0
  %v676 = vpack.c.bf16 %v675, %v675
  %v677 = vld [vmem:[%s5] sm:$0xf]
  %v678 = vld [vmem:[%s5 + $0x4] sm:$0xf]
  %v679 = vld [vmem:[%s5 + $0x8] sm:$0xf]
  %v680 = vld [vmem:[%s5 + $0xc] sm:$0xf]
  %v681 = vld [vmem:[%s6] sm:$0x1]
  %v683 = vlaneseq
  %v684 = vshrl.u32 %v683, 7
  %v685 = vsub.s32 0, %v684
  %v686 = vrot.slane %v681, %v685
  %v692 = vunpack.c.l.b16 %v677
  %v693 = vunpack.c.l.b16 %v678
  %v694 = vunpack.c.l.b16 %v679
  %v695 = vunpack.c.l.b16 %v680
  %v696 = vpack.c.b16 %v693, %v692
  %v697 = vpack.c.b16 %v695, %v694
  %vm700 = vcmask 261120
  %v702 = vsel %vm700, %v676, 0
  %704 = vmatprep.subr.bf16.mxu0 0
  %705 = vmatpush1.bf16.msra.mxu0 %v696
  %706 = vmatprep.subr.bf16.mxu0 0
  %707 = vmatpush1.bf16.msra.mxu0 %v697
  %708 = vmatprep.subr.bf16.mxu0 0
  %709 = vmatpush1.bf16.msra.mxu0 0
  %710 = vmatprep.subr.bf16.mxu0 0
  %711 = vmatpush1.bf16.msra.mxu0 0
  %712 = vmatprep.subr.bf16.mxu0 0
  %713 = vmatpush1.bf16.msra.mxu0 0
  %714 = vmatprep.subr.bf16.mxu0 0
  %715 = vmatpush1.bf16.msra.mxu0 0
  %716 = vmatprep.subr.bf16.mxu0 0
  %717 = vmatpush1.bf16.msra.mxu0 0
  %718 = vmatprep.subr.bf16.mxu0 0
  %719 = vmatpush1.bf16.msra.mxu0 0
  %720 = vmatprep.subr.bf16.mxu0 0
  %721 = vmatpush1.bf16.msra.mxu0 0
  %722 = vmatprep.subr.bf16.mxu0 0
  %723 = vmatpush1.bf16.msra.mxu0 0
  %724 = vmatprep.subr.bf16.mxu0 0
  %725 = vmatpush1.bf16.msra.mxu0 0
  %726 = vmatprep.subr.bf16.mxu0 0
  %727 = vmatpush1.bf16.msra.mxu0 0
  %728 = vmatprep.subr.bf16.mxu0 0
  %729 = vmatpush1.bf16.msra.mxu0 0
  %730 = vmatprep.subr.bf16.mxu0 0
  %731 = vmatpush1.bf16.msra.mxu0 0
  %732 = vmatprep.subr.bf16.mxu0 0
  %733 = vmatpush1.bf16.msra.mxu0 0
  %734 = vmatprep.subr.bf16.mxu0 0
  %735 = vmatpush1.bf16.msra.mxu0 0
  %736 = vmatprep.mubr.bf16.mxu0 0
  %737 = vmatmul.mubr.bf16.gmra.mrb[0].mxu0 %v702
  %v738 = vpop.f32.mrb[0].mxu0
  %v739 = vadd.f32 %v686, %v738
  %v740 = vpop.f32.mrb[0].mxu0
  %v741 = vpop.f32.mrb[0].mxu0
  %v742 = vpop.f32.mrb[0].mxu0
  %743 = vdwg.mxu0
  %744 = vmax.xlane.f32.xlu0 %v739
  %v745 = vpop.xlane.xlu0 %744
  %v746 = vsub.f32 %v739, %v745
  %v747 = vmul.f32 %v746, 1.442695
  %v748 = vpow.pop %v747
  %749 = vadd.xlane.f32.xlu0 %v748
  %v750 = vpop.xlane.xlu0 %749
  %v751 = vlog2.pop %v750
  %v752 = vmul.f32 %v751, 0.6931472
  %v753 = vadd.f32 %v752, %v745
  %v754 = vsub.f32 %v739, %v753
  %755 = vst [vmem:[%s7] sm:$0xff] %v754
  // Predicated region
  $region30: #{sortpool_forward.7} parent=0 // pred_check
    _
  $region31: #{sortpool_forward.7} parent=0 // pred_check_branch
    %757 = sbr.rel (0) target = $region33
  $region32: #{sortpool_forward.7} parent=0 // pred_region
    _
  $region33: #{sortpool_forward.7} parent=0 // pred_fallthru
    _
  // Predicated region
  $region34: #{sortpool_forward.7} parent=0 // pred_check
    _
  $region35: #{sortpool_forward.7} parent=0 // pred_check_branch
    %759 = sbr.rel (0) target = $region37
  $region36: #{sortpool_forward.7} parent=0 // pred_region
    _
  $region37: #{sortpool_forward.7} parent=0 // pred_fallthru
    _

</llo_original>
